<compile_context>
chip_gen: v6e
topology: v6e:2x2x1
jax: 0.10.0
libtpu: 0.0.40
codegen_flags: <defaults>
</compile_context>

<pallas_src>
import math

import jax
import jax.numpy as jnp
from jax.experimental import pallas as pl
from jax.experimental.pallas import tpu as pltpu

DIM = 32            # embed dim
NUM_HEADS = 4
HEAD_DIM = DIM // NUM_HEADS
MLP_RATIO = 4
HIDDEN = DIM * MLP_RATIO
EPS = 1e-5
SQRT2_INV = 0.7071067811865476

# Small compat shim (newer JAX exposes CompilerParams, older TPUCompilerParams).
_CompilerParams = getattr(pltpu, "CompilerParams", None) or getattr(
    pltpu, "TPUCompilerParams")


def _layernorm(x, w, b):
    mean = jnp.mean(x, axis=-1, keepdims=True)
    var = jnp.mean(jnp.square(x - mean), axis=-1, keepdims=True)
    return (x - mean) * jax.lax.rsqrt(var + EPS) * w + b


def _gelu_erf(x):
    return 0.5 * x * (1.0 + jax.lax.erf(x * SQRT2_INV))


def vit_block_kernel(x_ref, ln1w_ref, ln1b_ref, wqkv_ref, wo_ref,
                     ln2w_ref, ln2b_ref, w1_ref, b1_ref, w2_ref, b2_ref,
                     o_ref):
    x = x_ref[...]                                   # (bc, S, D): whole batch elements
    bc, s_len, d = x.shape
    n = bc * s_len

    # ---- LayerNorm 1 ----
    xn = _layernorm(x, ln1w_ref[0], ln1b_ref[0])     # (bc, S, D)
    xn2d = xn.reshape(n, d)

    # ---- Fused QKV projection: one MXU push, rhs contracts on sublanes ----
    qkv = jnp.dot(xn2d, wqkv_ref[...],
                  preferred_element_type=jnp.float32)        # (n, 3D)
    qkv = qkv.reshape(bc, s_len, 3 * d)

    # ---- Multi-head attention, block-local per batch element (no mask) ----
    wo = wo_ref[...]                                 # (D, D) = out_proj.weight.T
    attn = jnp.zeros((n, d), jnp.float32)
    for h in range(NUM_HEADS):                       # static unroll, H = 4
        lo = h * HEAD_DIM
        q = qkv[:, :, lo:lo + HEAD_DIM]              # (bc, S, hd) static 8-lane slices
        k = qkv[:, :, d + lo:d + lo + HEAD_DIM]      # (scale folded into Q weights)
        v = qkv[:, :, 2 * d + lo:2 * d + lo + HEAD_DIM]
        s = jnp.einsum('bqe,bke->bqk', q, k,
                       preferred_element_type=jnp.float32)   # (bc, S, S)
        s = s - jnp.max(s, axis=-1, keepdims=True)
        p = jnp.exp(s)                                        # EUP
        p = p * pl.reciprocal(jnp.sum(p, axis=-1, keepdims=True), approx=True)
        ctx = jnp.einsum('bqk,bke->bqe', p, v,
                         preferred_element_type=jnp.float32)  # (bc, S, hd)
        # Per-head slice of the pre-transposed out-projection; summing over heads
        # equals PyTorch's concat-then-project, with no lane concatenate.
        attn = attn + jnp.dot(ctx.reshape(n, HEAD_DIM), wo[lo:lo + HEAD_DIM, :],
                              preferred_element_type=jnp.float32)

    x2 = xn2d + attn                                 # residual uses norm1 output

    # ---- LayerNorm 2 + MLP (Linear -> exact-erf GELU -> Linear) ----
    xn2 = _layernorm(x2, ln2w_ref[0], ln2b_ref[0])
    h1 = jnp.dot(xn2, w1_ref[...], preferred_element_type=jnp.float32) + b1_ref[0]
    h2 = jnp.dot(_gelu_erf(h1), w2_ref[...],
                 preferred_element_type=jnp.float32) + b2_ref[0]
    o_ref[...] = (xn2 + h2).reshape(bc, s_len, d)    # residual uses norm2 output


def _pick_batch_chunk(batch, seq):
    """Batch elements per grid step.

    Large blocks amortize the ~0.35us/step pipeline overhead (v6e guidance:
    >=2048 token rows/step), but (a) keep >=2 grid steps when batch > 1 so a
    v7x megacore can split the "parallel" axis across both TensorCores, and
    (b) keep the per-block (bc, H, S, S) f32 score tensors well under the
    32 MiB default scoped-VMEM limit (and v7x's 64 MiB physical VMEM).
    """
    rows_cap = max(1, 2048 // max(seq, 1))
    score_cap = max(1, (8 << 20) // (NUM_HEADS * seq * seq * 4))
    bc = max(1, min(batch // 2 if batch > 1 else 1, rows_cap, score_cap))
    while batch % bc:
        bc -= 1
    return bc


def vit_block(x_sbd, params):
    """x_sbd: (S, B, D) in PyTorch nn.MultiheadAttention's (seq, batch, embed) layout."""
    seq, batch, d = x_sbd.shape
    assert d == DIM
    x_bsd = jnp.transpose(x_sbd, (1, 0, 2))          # batch-major for block-local attention
    bc = _pick_batch_chunk(batch, seq)

    # Parameters get constant index_maps -> DMA'd once, VMEM-resident across steps.
    param_specs = [
        pl.BlockSpec(p.shape, lambda b, _nd=p.ndim: (0,) * _nd) for p in params
    ]
    out = pl.pallas_call(
        vit_block_kernel,
        out_shape=jax.ShapeDtypeStruct((batch, seq, d), jnp.float32),
        grid_spec=pltpu.PrefetchScalarGridSpec(
            num_scalar_prefetch=0,
            grid=(batch // bc,),
            in_specs=[pl.BlockSpec((bc, seq, d), lambda b: (b, 0, 0))] + param_specs,
            out_specs=pl.BlockSpec((bc, seq, d), lambda b: (b, 0, 0)),
        ),
        compiler_params=_CompilerParams(dimension_semantics=("parallel",)),
    )(x_bsd, *params)
    return jnp.transpose(out, (1, 0, 2))


def vit_block_ref(x_sbd, params):
    """Pure-JAX reference (exact softmax / exact reciprocal), same param layout."""
    ln1w, ln1b, w_qkv, wo_t, ln2w, ln2b, w1_t, b1, w2_t, b2 = params
    seq, batch, d = x_sbd.shape
    xn = _layernorm(x_sbd, ln1w[0], ln1b[0])                       # (S, B, D)
    qkv = jnp.einsum('sbd,de->sbe', xn, w_qkv)                     # (S, B, 3D)
    q = qkv[..., :d].reshape(seq, batch, NUM_HEADS, HEAD_DIM)      # scale already folded
    k = qkv[..., d:2 * d].reshape(seq, batch, NUM_HEADS, HEAD_DIM)
    v = qkv[..., 2 * d:].reshape(seq, batch, NUM_HEADS, HEAD_DIM)
    s = jnp.einsum('qbhe,kbhe->bhqk', q, k)
    p = jax.nn.softmax(s, axis=-1)
    ctx = jnp.einsum('bhqk,kbhe->qbhe', p, v).reshape(seq, batch, d)
    attn = ctx @ wo_t                                              # no out_proj bias
    x2 = xn + attn
    xn2 = _layernorm(x2, ln2w[0], ln2b[0])
    h1 = xn2 @ w1_t + b1[0]
    return xn2 + _gelu_erf(h1) @ w2_t + b2[0]


def make_params(key):
    """Random parameters in PyTorch layouts, pre-transposed/fused for the kernel."""
    ks = jax.random.split(key, 10)
    in_proj = 0.02 * jax.random.normal(ks[0], (3 * DIM, DIM), jnp.float32)  # in_proj_weight
    wo = 0.02 * jax.random.normal(ks[1], (DIM, DIM), jnp.float32)           # out_proj.weight
    w1 = 0.02 * jax.random.normal(ks[2], (HIDDEN, DIM), jnp.float32)
    b1 = 0.01 * jax.random.normal(ks[3], (1, HIDDEN), jnp.float32)
    w2 = 0.02 * jax.random.normal(ks[4], (DIM, HIDDEN), jnp.float32)
    b2 = 0.01 * jax.random.normal(ks[5], (1, DIM), jnp.float32)
    ln1w = 1.0 + 0.1 * jax.random.normal(ks[6], (1, DIM), jnp.float32)
    ln1b = 0.1 * jax.random.normal(ks[7], (1, DIM), jnp.float32)
    ln2w = 1.0 + 0.1 * jax.random.normal(ks[8], (1, DIM), jnp.float32)
    ln2b = 0.1 * jax.random.normal(ks[9], (1, DIM), jnp.float32)

    scale = 1.0 / math.sqrt(HEAD_DIM)
    # Fused, pre-transposed QKV weight (D, 3D): column c of the Q/K/V part equals
    # in_proj row c, so head h occupies lanes [h*hd, (h+1)*hd) exactly as in PyTorch.
    w_qkv = jnp.concatenate(
        [in_proj[:DIM].T * scale,                   # 1/sqrt(head_dim) folded into Q
         in_proj[DIM:2 * DIM].T,
         in_proj[2 * DIM:].T], axis=1)              # (D, 3D)
    wo_t = wo.T                                     # (D, D): out = ctx @ out_proj.weight.T
    return (ln1w, ln1b, w_qkv, wo_t, ln2w, ln2b, w1.T, b1, w2.T, b2)


if __name__ == "__main__":
    key = jax.random.PRNGKey(0)
    k_x, k_p = jax.random.split(key)
    S, B = 8, 2                                     # (seq, batch) — PyTorch MHA convention
    x = jax.random.normal(k_x, (S, B, DIM), jnp.float32)
    params = make_params(k_p)

    out = jax.block_until_ready(jax.jit(vit_block)(x, params))
    ref = vit_block_ref(x, params)

    assert out.shape == (S, B, DIM)
    max_err = jnp.max(jnp.abs(out - ref))
    assert jnp.allclose(out, ref, atol=1e-3, rtol=1e-3), (
        f"Pallas kernel mismatch vs JAX reference (max abs err {max_err})")
    print("KERNEL_OK")
</pallas_src>

<mosaic_0001>
module attributes {stable_mosaic.version = 11 : i64} {
  func.func @vit_block_kernel(%arg0: i32, %arg1: memref<1x8x32xf32, #tpu.memory_space<vmem>>, %arg2: memref<1x32xf32, #tpu.memory_space<vmem>>, %arg3: memref<1x32xf32, #tpu.memory_space<vmem>>, %arg4: memref<32x96xf32, #tpu.memory_space<vmem>>, %arg5: memref<32x32xf32, #tpu.memory_space<vmem>>, %arg6: memref<1x32xf32, #tpu.memory_space<vmem>>, %arg7: memref<1x32xf32, #tpu.memory_space<vmem>>, %arg8: memref<32x128xf32, #tpu.memory_space<vmem>>, %arg9: memref<1x128xf32, #tpu.memory_space<vmem>>, %arg10: memref<128x32xf32, #tpu.memory_space<vmem>>, %arg11: memref<1x32xf32, #tpu.memory_space<vmem>>, %arg12: memref<1x8x32xf32, #tpu.memory_space<vmem>>) attributes {dimension_semantics = [#tpu.dimension_semantics<parallel>], iteration_bounds = array<i64: 2>, scalar_prefetch = 0 : i64, scratch_operands = 0 : i64, tpu.core_type = #tpu.core_type<tc>, window_params = [{transform_indices = @transform_0, window_bounds = array<i64: 1, 8, 32>}, {pipeline_mode = #tpu.pipeline_mode<synchronous>, transform_indices = @transform_1, window_bounds = array<i64: 1, 32>}, {pipeline_mode = #tpu.pipeline_mode<synchronous>, transform_indices = @transform_2, window_bounds = array<i64: 1, 32>}, {pipeline_mode = #tpu.pipeline_mode<synchronous>, transform_indices = @transform_3, window_bounds = array<i64: 32, 96>}, {pipeline_mode = #tpu.pipeline_mode<synchronous>, transform_indices = @transform_4, window_bounds = array<i64: 32, 32>}, {pipeline_mode = #tpu.pipeline_mode<synchronous>, transform_indices = @transform_5, window_bounds = array<i64: 1, 32>}, {pipeline_mode = #tpu.pipeline_mode<synchronous>, transform_indices = @transform_6, window_bounds = array<i64: 1, 32>}, {pipeline_mode = #tpu.pipeline_mode<synchronous>, transform_indices = @transform_7, window_bounds = array<i64: 32, 128>}, {pipeline_mode = #tpu.pipeline_mode<synchronous>, transform_indices = @transform_8, window_bounds = array<i64: 1, 128>}, {pipeline_mode = #tpu.pipeline_mode<synchronous>, transform_indices = @transform_9, window_bounds = array<i64: 128, 32>}, {pipeline_mode = #tpu.pipeline_mode<synchronous>, transform_indices = @transform_10, window_bounds = array<i64: 1, 32>}, {transform_indices = @transform_11, window_bounds = array<i64: 1, 8, 32>}]} {
    %c0 = arith.constant 0 : index
    %c0_0 = arith.constant 0 : index
    %c0_1 = arith.constant 0 : index
    %0 = vector.load %arg1[%c0, %c0_0, %c0_1] : memref<1x8x32xf32, #tpu.memory_space<vmem>>, vector<1x8x32xf32>
    %c0_2 = arith.constant 0 : index
    %c0_3 = arith.constant 0 : index
    %1 = vector.load %arg2[%c0_2, %c0_3] : memref<1x32xf32, #tpu.memory_space<vmem>>, vector<1x32xf32>
    %2 = vector.shape_cast %1 : vector<1x32xf32> to vector<32xf32>
    %c0_4 = arith.constant 0 : index
    %c0_5 = arith.constant 0 : index
    %3 = vector.load %arg3[%c0_4, %c0_5] : memref<1x32xf32, #tpu.memory_space<vmem>>, vector<1x32xf32>
    %4 = vector.shape_cast %3 : vector<1x32xf32> to vector<32xf32>
    %cst = arith.constant dense<0.000000e+00> : vector<1x8xf32>
    %5 = vector.multi_reduction <add>, %0, %cst [2] : vector<1x8x32xf32> to vector<1x8xf32>
    %6 = vector.shape_cast %5 : vector<1x8xf32> to vector<1x8x1xf32>
    %cst_6 = arith.constant 3.200000e+01 : f32
    %7 = vector.broadcast %cst_6 : f32 to vector<1x8x1xf32>
    %8 = arith.divf %6, %7 : vector<1x8x1xf32>
    %9 = vector.broadcast %8 : vector<1x8x1xf32> to vector<1x8x32xf32>
    %10 = arith.subf %0, %9 : vector<1x8x32xf32>
    %11 = arith.mulf %10, %10 : vector<1x8x32xf32>
    %cst_7 = arith.constant dense<0.000000e+00> : vector<1x8xf32>
    %12 = vector.multi_reduction <add>, %11, %cst_7 [2] : vector<1x8x32xf32> to vector<1x8xf32>
    %13 = vector.shape_cast %12 : vector<1x8xf32> to vector<1x8x1xf32>
    %cst_8 = arith.constant 3.200000e+01 : f32
    %14 = vector.broadcast %cst_8 : f32 to vector<1x8x1xf32>
    %15 = arith.divf %13, %14 : vector<1x8x1xf32>
    %16 = vector.broadcast %8 : vector<1x8x1xf32> to vector<1x8x32xf32>
    %17 = arith.subf %0, %16 : vector<1x8x32xf32>
    %cst_9 = arith.constant 9.99999974E-6 : f32
    %18 = vector.broadcast %cst_9 : f32 to vector<1x8x1xf32>
    %19 = arith.addf %15, %18 : vector<1x8x1xf32>
    %20 = math.rsqrt %19 : vector<1x8x1xf32>
    %21 = vector.broadcast %20 : vector<1x8x1xf32> to vector<1x8x32xf32>
    %22 = arith.mulf %17, %21 : vector<1x8x32xf32>
    %23 = vector.shape_cast %2 : vector<32xf32> to vector<1x1x32xf32>
    %24 = vector.broadcast %23 : vector<1x1x32xf32> to vector<1x8x32xf32>
    %25 = arith.mulf %22, %24 : vector<1x8x32xf32>
    %26 = vector.shape_cast %4 : vector<32xf32> to vector<1x1x32xf32>
    %27 = vector.broadcast %26 : vector<1x1x32xf32> to vector<1x8x32xf32>
    %28 = arith.addf %25, %27 : vector<1x8x32xf32>
    %29 = vector.shape_cast %28 : vector<1x8x32xf32> to vector<8x32xf32>
    %c0_10 = arith.constant 0 : index
    %c0_11 = arith.constant 0 : index
    %30 = vector.load %arg4[%c0_10, %c0_11] : memref<32x96xf32, #tpu.memory_space<vmem>>, vector<32x96xf32>
    %cst_12 = arith.constant dense<0.000000e+00> : vector<8x96xf32>
    %31 = tpu.matmul %29, %30, %cst_12 {dimension_numbers = #tpu.dot_dimension_numbers<[1], [0], [0], [1], [0, 0, 1, 1], [], []>} : vector<8x32xf32>, vector<32x96xf32>, vector<8x96xf32> -> vector<8x96xf32>
    %32 = vector.shape_cast %31 : vector<8x96xf32> to vector<1x8x96xf32>
    %c0_13 = arith.constant 0 : index
    %c0_14 = arith.constant 0 : index
    %33 = vector.load %arg5[%c0_13, %c0_14] : memref<32x32xf32, #tpu.memory_space<vmem>>, vector<32x32xf32>
    %cst_15 = arith.constant 0.000000e+00 : f32
    %34 = vector.broadcast %cst_15 : f32 to vector<8x32xf32>
    %35 = vector.extract_strided_slice %32 {offsets = [0, 0, 0], sizes = [1, 8, 8], strides = [1, 1, 1]} : vector<1x8x96xf32> to vector<1x8x8xf32>
    %36 = vector.extract_strided_slice %32 {offsets = [0, 0, 32], sizes = [1, 8, 8], strides = [1, 1, 1]} : vector<1x8x96xf32> to vector<1x8x8xf32>
    %37 = vector.extract_strided_slice %32 {offsets = [0, 0, 64], sizes = [1, 8, 8], strides = [1, 1, 1]} : vector<1x8x96xf32> to vector<1x8x8xf32>
    "tpu.trace_start"() <{level = 10 : i32, message = "bqe,bke->bqk"}> : () -> ()
    %cst_16 = arith.constant dense<0.000000e+00> : vector<1x8x8xf32>
    %38 = tpu.matmul %35, %36, %cst_16 {dimension_numbers = #tpu.dot_dimension_numbers<[2], [2], [1], [1], [0, 0, 0, 1, 1, 1], [0], [0]>} : vector<1x8x8xf32>, vector<1x8x8xf32>, vector<1x8x8xf32> -> vector<1x8x8xf32>
    "tpu.trace_stop"() : () -> ()
    %cst_17 = arith.constant dense<0xFF800000> : vector<1x8xf32>
    %39 = vector.multi_reduction <maximumf>, %38, %cst_17 [2] : vector<1x8x8xf32> to vector<1x8xf32>
    %40 = vector.shape_cast %39 : vector<1x8xf32> to vector<1x8x1xf32>
    %41 = vector.broadcast %40 : vector<1x8x1xf32> to vector<1x8x8xf32>
    %42 = arith.subf %38, %41 : vector<1x8x8xf32>
    %43 = math.exp %42 : vector<1x8x8xf32>
    %cst_18 = arith.constant dense<0.000000e+00> : vector<1x8xf32>
    %44 = vector.multi_reduction <add>, %43, %cst_18 [2] : vector<1x8x8xf32> to vector<1x8xf32>
    %45 = vector.shape_cast %44 : vector<1x8xf32> to vector<1x8x1xf32>
    %46 = tpu.reciprocal %45 {approx = true} : vector<1x8x1xf32> -> vector<1x8x1xf32>
    %47 = vector.broadcast %46 : vector<1x8x1xf32> to vector<1x8x8xf32>
    %48 = arith.mulf %43, %47 : vector<1x8x8xf32>
    "tpu.trace_start"() <{level = 10 : i32, message = "bqk,bke->bqe"}> : () -> ()
    %cst_19 = arith.constant dense<0.000000e+00> : vector<1x8x8xf32>
    %49 = tpu.matmul %48, %37, %cst_19 {dimension_numbers = #tpu.dot_dimension_numbers<[2], [1], [1], [2], [0, 0, 0, 1, 1, 2], [0], [0]>} : vector<1x8x8xf32>, vector<1x8x8xf32>, vector<1x8x8xf32> -> vector<1x8x8xf32>
    "tpu.trace_stop"() : () -> ()
    %50 = vector.shape_cast %49 : vector<1x8x8xf32> to vector<8x8xf32>
    %51 = vector.extract_strided_slice %33 {offsets = [0, 0], sizes = [8, 32], strides = [1, 1]} : vector<32x32xf32> to vector<8x32xf32>
    %cst_20 = arith.constant dense<0.000000e+00> : vector<8x32xf32>
    %52 = tpu.matmul %50, %51, %cst_20 {dimension_numbers = #tpu.dot_dimension_numbers<[1], [0], [0], [1], [0, 0, 1, 1], [], []>} : vector<8x8xf32>, vector<8x32xf32>, vector<8x32xf32> -> vector<8x32xf32>
    %53 = arith.addf %34, %52 : vector<8x32xf32>
    %54 = vector.extract_strided_slice %32 {offsets = [0, 0, 8], sizes = [1, 8, 8], strides = [1, 1, 1]} : vector<1x8x96xf32> to vector<1x8x8xf32>
    %55 = vector.extract_strided_slice %32 {offsets = [0, 0, 40], sizes = [1, 8, 8], strides = [1, 1, 1]} : vector<1x8x96xf32> to vector<1x8x8xf32>
    %56 = vector.extract_strided_slice %32 {offsets = [0, 0, 72], sizes = [1, 8, 8], strides = [1, 1, 1]} : vector<1x8x96xf32> to vector<1x8x8xf32>
    "tpu.trace_start"() <{level = 10 : i32, message = "bqe,bke->bqk"}> : () -> ()
    %cst_21 = arith.constant dense<0.000000e+00> : vector<1x8x8xf32>
    %57 = tpu.matmul %54, %55, %cst_21 {dimension_numbers = #tpu.dot_dimension_numbers<[2], [2], [1], [1], [0, 0, 0, 1, 1, 1], [0], [0]>} : vector<1x8x8xf32>, vector<1x8x8xf32>, vector<1x8x8xf32> -> vector<1x8x8xf32>
    "tpu.trace_stop"() : () -> ()
    %cst_22 = arith.constant dense<0xFF800000> : vector<1x8xf32>
    %58 = vector.multi_reduction <maximumf>, %57, %cst_22 [2] : vector<1x8x8xf32> to vector<1x8xf32>
    %59 = vector.shape_cast %58 : vector<1x8xf32> to vector<1x8x1xf32>
    %60 = vector.broadcast %59 : vector<1x8x1xf32> to vector<1x8x8xf32>
    %61 = arith.subf %57, %60 : vector<1x8x8xf32>
    %62 = math.exp %61 : vector<1x8x8xf32>
    %cst_23 = arith.constant dense<0.000000e+00> : vector<1x8xf32>
    %63 = vector.multi_reduction <add>, %62, %cst_23 [2] : vector<1x8x8xf32> to vector<1x8xf32>
    %64 = vector.shape_cast %63 : vector<1x8xf32> to vector<1x8x1xf32>
    %65 = tpu.reciprocal %64 {approx = true} : vector<1x8x1xf32> -> vector<1x8x1xf32>
    %66 = vector.broadcast %65 : vector<1x8x1xf32> to vector<1x8x8xf32>
    %67 = arith.mulf %62, %66 : vector<1x8x8xf32>
    "tpu.trace_start"() <{level = 10 : i32, message = "bqk,bke->bqe"}> : () -> ()
    %cst_24 = arith.constant dense<0.000000e+00> : vector<1x8x8xf32>
    %68 = tpu.matmul %67, %56, %cst_24 {dimension_numbers = #tpu.dot_dimension_numbers<[2], [1], [1], [2], [0, 0, 0, 1, 1, 2], [0], [0]>} : vector<1x8x8xf32>, vector<1x8x8xf32>, vector<1x8x8xf32> -> vector<1x8x8xf32>
    "tpu.trace_stop"() : () -> ()
    %69 = vector.shape_cast %68 : vector<1x8x8xf32> to vector<8x8xf32>
    %70 = vector.extract_strided_slice %33 {offsets = [8, 0], sizes = [8, 32], strides = [1, 1]} : vector<32x32xf32> to vector<8x32xf32>
    %cst_25 = arith.constant dense<0.000000e+00> : vector<8x32xf32>
    %71 = tpu.matmul %69, %70, %cst_25 {dimension_numbers = #tpu.dot_dimension_numbers<[1], [0], [0], [1], [0, 0, 1, 1], [], []>} : vector<8x8xf32>, vector<8x32xf32>, vector<8x32xf32> -> vector<8x32xf32>
    %72 = arith.addf %53, %71 : vector<8x32xf32>
    %73 = vector.extract_strided_slice %32 {offsets = [0, 0, 16], sizes = [1, 8, 8], strides = [1, 1, 1]} : vector<1x8x96xf32> to vector<1x8x8xf32>
    %74 = vector.extract_strided_slice %32 {offsets = [0, 0, 48], sizes = [1, 8, 8], strides = [1, 1, 1]} : vector<1x8x96xf32> to vector<1x8x8xf32>
    %75 = vector.extract_strided_slice %32 {offsets = [0, 0, 80], sizes = [1, 8, 8], strides = [1, 1, 1]} : vector<1x8x96xf32> to vector<1x8x8xf32>
    "tpu.trace_start"() <{level = 10 : i32, message = "bqe,bke->bqk"}> : () -> ()
    %cst_26 = arith.constant dense<0.000000e+00> : vector<1x8x8xf32>
    %76 = tpu.matmul %73, %74, %cst_26 {dimension_numbers = #tpu.dot_dimension_numbers<[2], [2], [1], [1], [0, 0, 0, 1, 1, 1], [0], [0]>} : vector<1x8x8xf32>, vector<1x8x8xf32>, vector<1x8x8xf32> -> vector<1x8x8xf32>
    "tpu.trace_stop"() : () -> ()
    %cst_27 = arith.constant dense<0xFF800000> : vector<1x8xf32>
    %77 = vector.multi_reduction <maximumf>, %76, %cst_27 [2] : vector<1x8x8xf32> to vector<1x8xf32>
    %78 = vector.shape_cast %77 : vector<1x8xf32> to vector<1x8x1xf32>
    %79 = vector.broadcast %78 : vector<1x8x1xf32> to vector<1x8x8xf32>
    %80 = arith.subf %76, %79 : vector<1x8x8xf32>
    %81 = math.exp %80 : vector<1x8x8xf32>
    %cst_28 = arith.constant dense<0.000000e+00> : vector<1x8xf32>
    %82 = vector.multi_reduction <add>, %81, %cst_28 [2] : vector<1x8x8xf32> to vector<1x8xf32>
    %83 = vector.shape_cast %82 : vector<1x8xf32> to vector<1x8x1xf32>
    %84 = tpu.reciprocal %83 {approx = true} : vector<1x8x1xf32> -> vector<1x8x1xf32>
    %85 = vector.broadcast %84 : vector<1x8x1xf32> to vector<1x8x8xf32>
    %86 = arith.mulf %81, %85 : vector<1x8x8xf32>
    "tpu.trace_start"() <{level = 10 : i32, message = "bqk,bke->bqe"}> : () -> ()
    %cst_29 = arith.constant dense<0.000000e+00> : vector<1x8x8xf32>
    %87 = tpu.matmul %86, %75, %cst_29 {dimension_numbers = #tpu.dot_dimension_numbers<[2], [1], [1], [2], [0, 0, 0, 1, 1, 2], [0], [0]>} : vector<1x8x8xf32>, vector<1x8x8xf32>, vector<1x8x8xf32> -> vector<1x8x8xf32>
    "tpu.trace_stop"() : () -> ()
    %88 = vector.shape_cast %87 : vector<1x8x8xf32> to vector<8x8xf32>
    %89 = vector.extract_strided_slice %33 {offsets = [16, 0], sizes = [8, 32], strides = [1, 1]} : vector<32x32xf32> to vector<8x32xf32>
    %cst_30 = arith.constant dense<0.000000e+00> : vector<8x32xf32>
    %90 = tpu.matmul %88, %89, %cst_30 {dimension_numbers = #tpu.dot_dimension_numbers<[1], [0], [0], [1], [0, 0, 1, 1], [], []>} : vector<8x8xf32>, vector<8x32xf32>, vector<8x32xf32> -> vector<8x32xf32>
    %91 = arith.addf %72, %90 : vector<8x32xf32>
    %92 = vector.extract_strided_slice %32 {offsets = [0, 0, 24], sizes = [1, 8, 8], strides = [1, 1, 1]} : vector<1x8x96xf32> to vector<1x8x8xf32>
    %93 = vector.extract_strided_slice %32 {offsets = [0, 0, 56], sizes = [1, 8, 8], strides = [1, 1, 1]} : vector<1x8x96xf32> to vector<1x8x8xf32>
    %94 = vector.extract_strided_slice %32 {offsets = [0, 0, 88], sizes = [1, 8, 8], strides = [1, 1, 1]} : vector<1x8x96xf32> to vector<1x8x8xf32>
    "tpu.trace_start"() <{level = 10 : i32, message = "bqe,bke->bqk"}> : () -> ()
    %cst_31 = arith.constant dense<0.000000e+00> : vector<1x8x8xf32>
    %95 = tpu.matmul %92, %93, %cst_31 {dimension_numbers = #tpu.dot_dimension_numbers<[2], [2], [1], [1], [0, 0, 0, 1, 1, 1], [0], [0]>} : vector<1x8x8xf32>, vector<1x8x8xf32>, vector<1x8x8xf32> -> vector<1x8x8xf32>
    "tpu.trace_stop"() : () -> ()
    %cst_32 = arith.constant dense<0xFF800000> : vector<1x8xf32>
    %96 = vector.multi_reduction <maximumf>, %95, %cst_32 [2] : vector<1x8x8xf32> to vector<1x8xf32>
    %97 = vector.shape_cast %96 : vector<1x8xf32> to vector<1x8x1xf32>
    %98 = vector.broadcast %97 : vector<1x8x1xf32> to vector<1x8x8xf32>
    %99 = arith.subf %95, %98 : vector<1x8x8xf32>
    %100 = math.exp %99 : vector<1x8x8xf32>
    %cst_33 = arith.constant dense<0.000000e+00> : vector<1x8xf32>
    %101 = vector.multi_reduction <add>, %100, %cst_33 [2] : vector<1x8x8xf32> to vector<1x8xf32>
    %102 = vector.shape_cast %101 : vector<1x8xf32> to vector<1x8x1xf32>
    %103 = tpu.reciprocal %102 {approx = true} : vector<1x8x1xf32> -> vector<1x8x1xf32>
    %104 = vector.broadcast %103 : vector<1x8x1xf32> to vector<1x8x8xf32>
    %105 = arith.mulf %100, %104 : vector<1x8x8xf32>
    "tpu.trace_start"() <{level = 10 : i32, message = "bqk,bke->bqe"}> : () -> ()
    %cst_34 = arith.constant dense<0.000000e+00> : vector<1x8x8xf32>
    %106 = tpu.matmul %105, %94, %cst_34 {dimension_numbers = #tpu.dot_dimension_numbers<[2], [1], [1], [2], [0, 0, 0, 1, 1, 2], [0], [0]>} : vector<1x8x8xf32>, vector<1x8x8xf32>, vector<1x8x8xf32> -> vector<1x8x8xf32>
    "tpu.trace_stop"() : () -> ()
    %107 = vector.shape_cast %106 : vector<1x8x8xf32> to vector<8x8xf32>
    %108 = vector.extract_strided_slice %33 {offsets = [24, 0], sizes = [8, 32], strides = [1, 1]} : vector<32x32xf32> to vector<8x32xf32>
    %cst_35 = arith.constant dense<0.000000e+00> : vector<8x32xf32>
    %109 = tpu.matmul %107, %108, %cst_35 {dimension_numbers = #tpu.dot_dimension_numbers<[1], [0], [0], [1], [0, 0, 1, 1], [], []>} : vector<8x8xf32>, vector<8x32xf32>, vector<8x32xf32> -> vector<8x32xf32>
    %110 = arith.addf %91, %109 : vector<8x32xf32>
    %111 = arith.addf %29, %110 : vector<8x32xf32>
    %c0_36 = arith.constant 0 : index
    %c0_37 = arith.constant 0 : index
    %112 = vector.load %arg6[%c0_36, %c0_37] : memref<1x32xf32, #tpu.memory_space<vmem>>, vector<1x32xf32>
    %113 = vector.shape_cast %112 : vector<1x32xf32> to vector<32xf32>
    %c0_38 = arith.constant 0 : index
    %c0_39 = arith.constant 0 : index
    %114 = vector.load %arg7[%c0_38, %c0_39] : memref<1x32xf32, #tpu.memory_space<vmem>>, vector<1x32xf32>
    %115 = vector.shape_cast %114 : vector<1x32xf32> to vector<32xf32>
    %cst_40 = arith.constant dense<0.000000e+00> : vector<8xf32>
    %116 = vector.multi_reduction <add>, %111, %cst_40 [1] : vector<8x32xf32> to vector<8xf32>
    %117 = vector.shape_cast %116 : vector<8xf32> to vector<8x1xf32>
    %cst_41 = arith.constant 3.200000e+01 : f32
    %118 = vector.broadcast %cst_41 : f32 to vector<8x1xf32>
    %119 = arith.divf %117, %118 : vector<8x1xf32>
    %120 = vector.broadcast %119 : vector<8x1xf32> to vector<8x32xf32>
    %121 = arith.subf %111, %120 : vector<8x32xf32>
    %122 = arith.mulf %121, %121 : vector<8x32xf32>
    %cst_42 = arith.constant dense<0.000000e+00> : vector<8xf32>
    %123 = vector.multi_reduction <add>, %122, %cst_42 [1] : vector<8x32xf32> to vector<8xf32>
    %124 = vector.shape_cast %123 : vector<8xf32> to vector<8x1xf32>
    %cst_43 = arith.constant 3.200000e+01 : f32
    %125 = vector.broadcast %cst_43 : f32 to vector<8x1xf32>
    %126 = arith.divf %124, %125 : vector<8x1xf32>
    %127 = vector.broadcast %119 : vector<8x1xf32> to vector<8x32xf32>
    %128 = arith.subf %111, %127 : vector<8x32xf32>
    %cst_44 = arith.constant 9.99999974E-6 : f32
    %129 = vector.broadcast %cst_44 : f32 to vector<8x1xf32>
    %130 = arith.addf %126, %129 : vector<8x1xf32>
    %131 = math.rsqrt %130 : vector<8x1xf32>
    %132 = vector.broadcast %131 : vector<8x1xf32> to vector<8x32xf32>
    %133 = arith.mulf %128, %132 : vector<8x32xf32>
    %134 = vector.shape_cast %113 : vector<32xf32> to vector<1x32xf32>
    %135 = vector.broadcast %134 : vector<1x32xf32> to vector<8x32xf32>
    %136 = arith.mulf %133, %135 : vector<8x32xf32>
    %137 = vector.shape_cast %115 : vector<32xf32> to vector<1x32xf32>
    %138 = vector.broadcast %137 : vector<1x32xf32> to vector<8x32xf32>
    %139 = arith.addf %136, %138 : vector<8x32xf32>
    %c0_45 = arith.constant 0 : index
    %c0_46 = arith.constant 0 : index
    %140 = vector.load %arg8[%c0_45, %c0_46] : memref<32x128xf32, #tpu.memory_space<vmem>>, vector<32x128xf32>
    %cst_47 = arith.constant dense<0.000000e+00> : vector<8x128xf32>
    %141 = tpu.matmul %139, %140, %cst_47 {dimension_numbers = #tpu.dot_dimension_numbers<[1], [0], [0], [1], [0, 0, 1, 1], [], []>} : vector<8x32xf32>, vector<32x128xf32>, vector<8x128xf32> -> vector<8x128xf32>
    %c0_48 = arith.constant 0 : index
    %c0_49 = arith.constant 0 : index
    %142 = vector.load %arg9[%c0_48, %c0_49] : memref<1x128xf32, #tpu.memory_space<vmem>>, vector<1x128xf32>
    %143 = vector.shape_cast %142 : vector<1x128xf32> to vector<128xf32>
    %144 = vector.shape_cast %143 : vector<128xf32> to vector<1x128xf32>
    %145 = vector.broadcast %144 : vector<1x128xf32> to vector<8x128xf32>
    %146 = arith.addf %141, %145 : vector<8x128xf32>
    %cst_50 = arith.constant 5.000000e-01 : f32
    %147 = vector.broadcast %cst_50 : f32 to vector<8x128xf32>
    %148 = arith.mulf %147, %146 : vector<8x128xf32>
    %cst_51 = arith.constant 0.707106769 : f32
    %149 = vector.broadcast %cst_51 : f32 to vector<8x128xf32>
    %150 = arith.mulf %146, %149 : vector<8x128xf32>
    %151 = math.erf %150 : vector<8x128xf32>
    %cst_52 = arith.constant 1.000000e+00 : f32
    %152 = vector.broadcast %cst_52 : f32 to vector<8x128xf32>
    %153 = arith.addf %152, %151 : vector<8x128xf32>
    %154 = arith.mulf %148, %153 : vector<8x128xf32>
    %c0_53 = arith.constant 0 : index
    %c0_54 = arith.constant 0 : index
    %155 = vector.load %arg10[%c0_53, %c0_54] : memref<128x32xf32, #tpu.memory_space<vmem>>, vector<128x32xf32>
    %cst_55 = arith.constant dense<0.000000e+00> : vector<8x32xf32>
    %156 = tpu.matmul %154, %155, %cst_55 {dimension_numbers = #tpu.dot_dimension_numbers<[1], [0], [0], [1], [0, 0, 1, 1], [], []>} : vector<8x128xf32>, vector<128x32xf32>, vector<8x32xf32> -> vector<8x32xf32>
    %c0_56 = arith.constant 0 : index
    %c0_57 = arith.constant 0 : index
    %157 = vector.load %arg11[%c0_56, %c0_57] : memref<1x32xf32, #tpu.memory_space<vmem>>, vector<1x32xf32>
    %158 = vector.shape_cast %157 : vector<1x32xf32> to vector<32xf32>
    %159 = vector.shape_cast %158 : vector<32xf32> to vector<1x32xf32>
    %160 = vector.broadcast %159 : vector<1x32xf32> to vector<8x32xf32>
    %161 = arith.addf %156, %160 : vector<8x32xf32>
    %162 = arith.addf %139, %161 : vector<8x32xf32>
    %163 = vector.shape_cast %162 : vector<8x32xf32> to vector<1x8x32xf32>
    %c0_58 = arith.constant 0 : index
    %c0_59 = arith.constant 0 : index
    %c0_60 = arith.constant 0 : index
    %164 = vector.load %arg12[%c0_58, %c0_59, %c0_60] : memref<1x8x32xf32, #tpu.memory_space<vmem>>, vector<1x8x32xf32>
    tpu.vector_store %arg12[%c0_58, %c0_59, %c0_60], %163 {strides = array<i32>} : memref<1x8x32xf32, #tpu.memory_space<vmem>>, vector<1x8x32xf32>,
    return
  }
  func.func @transform_0(%arg0: i32) -> (i32, i32, i32) {
    %c0_i32 = arith.constant 0 : i32
    %c0_i32_0 = arith.constant 0 : i32
    %c0_i32_1 = arith.constant 0 : i32
    return %arg0, %c0_i32, %c0_i32_0 : i32, i32, i32
  }
  func.func @transform_1(%arg0: i32) -> (i32, i32) {
    %c0_i32 = arith.constant 0 : i32
    %c0_i32_0 = arith.constant 0 : i32
    %c0_i32_1 = arith.constant 0 : i32
    return %c0_i32, %c0_i32_0 : i32, i32
  }
  func.func @transform_2(%arg0: i32) -> (i32, i32) {
    %c0_i32 = arith.constant 0 : i32
    %c0_i32_0 = arith.constant 0 : i32
    %c0_i32_1 = arith.constant 0 : i32
    return %c0_i32, %c0_i32_0 : i32, i32
  }
  func.func @transform_3(%arg0: i32) -> (i32, i32) {
    %c0_i32 = arith.constant 0 : i32
    %c0_i32_0 = arith.constant 0 : i32
    %c0_i32_1 = arith.constant 0 : i32
    return %c0_i32, %c0_i32_0 : i32, i32
  }
  func.func @transform_4(%arg0: i32) -> (i32, i32) {
    %c0_i32 = arith.constant 0 : i32
    %c0_i32_0 = arith.constant 0 : i32
    %c0_i32_1 = arith.constant 0 : i32
    return %c0_i32, %c0_i32_0 : i32, i32
  }
  func.func @transform_5(%arg0: i32) -> (i32, i32) {
    %c0_i32 = arith.constant 0 : i32
    %c0_i32_0 = arith.constant 0 : i32
    %c0_i32_1 = arith.constant 0 : i32
    return %c0_i32, %c0_i32_0 : i32, i32
  }
  func.func @transform_6(%arg0: i32) -> (i32, i32) {
    %c0_i32 = arith.constant 0 : i32
    %c0_i32_0 = arith.constant 0 : i32
    %c0_i32_1 = arith.constant 0 : i32
    return %c0_i32, %c0_i32_0 : i32, i32
  }
  func.func @transform_7(%arg0: i32) -> (i32, i32) {
    %c0_i32 = arith.constant 0 : i32
    %c0_i32_0 = arith.constant 0 : i32
    %c0_i32_1 = arith.constant 0 : i32
    return %c0_i32, %c0_i32_0 : i32, i32
  }
  func.func @transform_8(%arg0: i32) -> (i32, i32) {
    %c0_i32 = arith.constant 0 : i32
    %c0_i32_0 = arith.constant 0 : i32
    %c0_i32_1 = arith.constant 0 : i32
    return %c0_i32, %c0_i32_0 : i32, i32
  }
  func.func @transform_9(%arg0: i32) -> (i32, i32) {
    %c0_i32 = arith.constant 0 : i32
    %c0_i32_0 = arith.constant 0 : i32
    %c0_i32_1 = arith.constant 0 : i32
    return %c0_i32, %c0_i32_0 : i32, i32
  }
  func.func @transform_10(%arg0: i32) -> (i32, i32) {
    %c0_i32 = arith.constant 0 : i32
    %c0_i32_0 = arith.constant 0 : i32
    %c0_i32_1 = arith.constant 0 : i32
    return %c0_i32, %c0_i32_0 : i32, i32
  }
  func.func @transform_11(%arg0: i32) -> (i32, i32, i32) {
    %c0_i32 = arith.constant 0 : i32
    %c0_i32_0 = arith.constant 0 : i32
    %c0_i32_1 = arith.constant 0 : i32
    return %arg0, %c0_i32, %c0_i32_0 : i32, i32, i32
  }
}

</mosaic_0001>

<llo_original>
// kernel: vit_block.1
$region0: #{vit_block.1}
  #allocation0 [shape = 'u32[]', space=smem, size = 0x4, offset = 0x4, fixed_abs, tag = 'smem constant byte address 0x4 - core index']
  #allocation1 [shape = 'u32[144,128]{1,0:T(1,128)}', space=vmem, size = 0x12000, scoped, tag = 'internal scratch']
  %s0 = inlined_call_operand.vmem [shape: f32[2,8,32], index: 0, kind: input, shape index: {}]
  %s1 = inlined_call_operand.vmem [shape: f32[1,32], index: 1, kind: input, shape index: {}]
  %s2 = inlined_call_operand.vmem [shape: f32[1,32], index: 2, kind: input, shape index: {}]
  %s3 = inlined_call_operand.vmem [shape: f32[32,96], index: 3, kind: input, shape index: {}]
  %s4 = inlined_call_operand.vmem [shape: f32[32,32], index: 4, kind: input, shape index: {}]
  %s5 = inlined_call_operand.vmem [shape: f32[1,32], index: 5, kind: input, shape index: {}]
  %s6 = inlined_call_operand.vmem [shape: f32[1,32], index: 6, kind: input, shape index: {}]
  %s7 = inlined_call_operand.vmem [shape: f32[32,128], index: 7, kind: input, shape index: {}]
  %s8 = inlined_call_operand.vmem [shape: f32[1,128], index: 8, kind: input, shape index: {}]
  %s9 = inlined_call_operand.vmem [shape: f32[128,32], index: 9, kind: input, shape index: {}]
  %s10 = inlined_call_operand.vmem [shape: f32[1,32], index: 10, kind: input, shape index: {}]
  %s11 = inlined_call_operand.vmem [shape: f32[2,8,32], index: 11, kind: output, shape index: {}]
  %s12 = sld [smem:[#allocation0]]
  $region77: #{vit_block.1} parent=0
    _
  %s14 = ssub.s32 1, %s12
  %s15 = scalar_select 0, %s14, %s12
  loop: start=0, step=1, limit=4
  $region2: #{vit_block.1} parent=0 // loop_pre_header
    _
  $region3: #{vit_block.1} parent=0 // loop_header
    %s17 = sphi 0, %s21
    %p18 = scmp.ge.s32.totalorder %s17, 4
    %s27 = sphi 0, %s29
    %s30 = sphi 0, %s27
    %s31 = sphi 0, %s30
    %s47 = sphi 0, %s31
    %s51 = sphi 0, %s51
    %s53 = sphi 0, %s51
    %s54 = sphi 0, %s53
    %s68 = sphi 0, %s54
    %s72 = sphi 0, %s72
    %s74 = sphi 0, %s72
    %s75 = sphi 0, %s74
    %s89 = sphi 0, %s75
    %s93 = sphi 0, %s93
    %s95 = sphi 0, %s93
    %s96 = sphi 0, %s95
    %s110 = sphi 0, %s96
    %s114 = sphi 0, %s114
    %s116 = sphi 0, %s114
    %s117 = sphi 0, %s116
    %s131 = sphi 0, %s117
    %s135 = sphi 0, %s135
    %s137 = sphi 0, %s135
    %s138 = sphi 0, %s137
    %s152 = sphi 0, %s138
    %s156 = sphi 0, %s156
    %s158 = sphi 0, %s156
    %s159 = sphi 0, %s158
    %s173 = sphi 0, %s159
    %s177 = sphi 0, %s177
    %s179 = sphi 0, %s177
    %s180 = sphi 0, %s179
    %s194 = sphi 0, %s180
    %s198 = sphi 0, %s198
    %s200 = sphi 0, %s198
    %s201 = sphi 0, %s200
    %s215 = sphi 0, %s201
    %s219 = sphi 0, %s219
    %s221 = sphi 0, %s219
    %s222 = sphi 0, %s221
    %s236 = sphi 0, %s222
    %s240 = sphi 0, %s240
    %s242 = sphi 0, %s240
    %s243 = sphi 0, %s242
    %s257 = sphi 0, %s243
    %s263 = sphi 0, %s265
    %s266 = sphi 0, %s263
    %s267 = sphi 0, %s266
    %s283 = sphi 0, %s267
  $region4: #{vit_block.1} parent=0 // loop_header_branch
    %20 = sbr.rel (%p18) target = $region8
  $region5: #{vit_block.1} parent=0 // loop_body
    %s22 = ssub.s32 %s17, 1
    %s23 = ssub.s32 %s17, 2
    %s24 = sadd.s32 %s17, 1
    %s25 = ssub.s32 %s17, %s24
    %p26 = scmp.eq.s32.totalorder %s25, 0
    %s28 = sadd.s32 %s27, 1
    %s29 = scalar_select %p26, %s27, %s28
    %p32 = pneg %p26
    %p33 = scmp.eq.s32.totalorder %s17, 1
    %p34 = por %p32, %p33
    %p35 = scmp.ne.s32.totalorder %s27, %s30
    %p36 = scmp.eq.s32.totalorder %s17, 0
    %p37 = por %p35, %p36
    %p38 = scmp.ne.s32.totalorder %s27, %s30
    %p39 = scmp.eq.s32.totalorder %s22, 1
    %p40 = por %p38, %p39
    %p41 = scmp.ne.s32.totalorder %s30, %s31
    %p42 = scmp.eq.s32.totalorder %s22, 0
    %p43 = por %p41, %p42
    %p44 = scmp.ne.s32.totalorder %s30, %s31
    %p45 = scmp.eq.s32.totalorder %s23, 1
    %p46 = por %p44, %p45
    %p48 = scmp.ne.s32.totalorder %s31, %s47
    %p49 = scmp.eq.s32.totalorder %s23, 0
    %p50 = por %p48, %p49
    %s52 = sadd.s32 %s51, 1
    %p55 = scmp.eq.s32.totalorder %s17, 1
    %p56 = scmp.ne.s32.totalorder %s51, %s53
    %p57 = scmp.eq.s32.totalorder %s17, 0
    %p58 = por %p56, %p57
    %p59 = scmp.ne.s32.totalorder %s51, %s53
    %p60 = scmp.eq.s32.totalorder %s22, 1
    %p61 = por %p59, %p60
    %p62 = scmp.ne.s32.totalorder %s53, %s54
    %p63 = scmp.eq.s32.totalorder %s22, 0
    %p64 = por %p62, %p63
    %p65 = scmp.ne.s32.totalorder %s53, %s54
    %p66 = scmp.eq.s32.totalorder %s23, 1
    %p67 = por %p65, %p66
    %p69 = scmp.ne.s32.totalorder %s54, %s68
    %p70 = scmp.eq.s32.totalorder %s23, 0
    %p71 = por %p69, %p70
    %s73 = sadd.s32 %s72, 1
    %p76 = scmp.eq.s32.totalorder %s17, 1
    %p77 = scmp.ne.s32.totalorder %s72, %s74
    %p78 = scmp.eq.s32.totalorder %s17, 0
    %p79 = por %p77, %p78
    %p80 = scmp.ne.s32.totalorder %s72, %s74
    %p81 = scmp.eq.s32.totalorder %s22, 1
    %p82 = por %p80, %p81
    %p83 = scmp.ne.s32.totalorder %s74, %s75
    %p84 = scmp.eq.s32.totalorder %s22, 0
    %p85 = por %p83, %p84
    %p86 = scmp.ne.s32.totalorder %s74, %s75
    %p87 = scmp.eq.s32.totalorder %s23, 1
    %p88 = por %p86, %p87
    %p90 = scmp.ne.s32.totalorder %s75, %s89
    %p91 = scmp.eq.s32.totalorder %s23, 0
    %p92 = por %p90, %p91
    %s94 = sadd.s32 %s93, 1
    %p97 = scmp.eq.s32.totalorder %s17, 1
    %p98 = scmp.ne.s32.totalorder %s93, %s95
    %p99 = scmp.eq.s32.totalorder %s17, 0
    %p100 = por %p98, %p99
    %p101 = scmp.ne.s32.totalorder %s93, %s95
    %p102 = scmp.eq.s32.totalorder %s22, 1
    %p103 = por %p101, %p102
    %p104 = scmp.ne.s32.totalorder %s95, %s96
    %p105 = scmp.eq.s32.totalorder %s22, 0
    %p106 = por %p104, %p105
    %p107 = scmp.ne.s32.totalorder %s95, %s96
    %p108 = scmp.eq.s32.totalorder %s23, 1
    %p109 = por %p107, %p108
    %p111 = scmp.ne.s32.totalorder %s96, %s110
    %p112 = scmp.eq.s32.totalorder %s23, 0
    %p113 = por %p111, %p112
    %s115 = sadd.s32 %s114, 1
    %p118 = scmp.eq.s32.totalorder %s17, 1
    %p119 = scmp.ne.s32.totalorder %s114, %s116
    %p120 = scmp.eq.s32.totalorder %s17, 0
    %p121 = por %p119, %p120
    %p122 = scmp.ne.s32.totalorder %s114, %s116
    %p123 = scmp.eq.s32.totalorder %s22, 1
    %p124 = por %p122, %p123
    %p125 = scmp.ne.s32.totalorder %s116, %s117
    %p126 = scmp.eq.s32.totalorder %s22, 0
    %p127 = por %p125, %p126
    %p128 = scmp.ne.s32.totalorder %s116, %s117
    %p129 = scmp.eq.s32.totalorder %s23, 1
    %p130 = por %p128, %p129
    %p132 = scmp.ne.s32.totalorder %s117, %s131
    %p133 = scmp.eq.s32.totalorder %s23, 0
    %p134 = por %p132, %p133
    %s136 = sadd.s32 %s135, 1
    %p139 = scmp.eq.s32.totalorder %s17, 1
    %p140 = scmp.ne.s32.totalorder %s135, %s137
    %p141 = scmp.eq.s32.totalorder %s17, 0
    %p142 = por %p140, %p141
    %p143 = scmp.ne.s32.totalorder %s135, %s137
    %p144 = scmp.eq.s32.totalorder %s22, 1
    %p145 = por %p143, %p144
    %p146 = scmp.ne.s32.totalorder %s137, %s138
    %p147 = scmp.eq.s32.totalorder %s22, 0
    %p148 = por %p146, %p147
    %p149 = scmp.ne.s32.totalorder %s137, %s138
    %p150 = scmp.eq.s32.totalorder %s23, 1
    %p151 = por %p149, %p150
    %p153 = scmp.ne.s32.totalorder %s138, %s152
    %p154 = scmp.eq.s32.totalorder %s23, 0
    %p155 = por %p153, %p154
    %s157 = sadd.s32 %s156, 1
    %p160 = scmp.eq.s32.totalorder %s17, 1
    %p161 = scmp.ne.s32.totalorder %s156, %s158
    %p162 = scmp.eq.s32.totalorder %s17, 0
    %p163 = por %p161, %p162
    %p164 = scmp.ne.s32.totalorder %s156, %s158
    %p165 = scmp.eq.s32.totalorder %s22, 1
    %p166 = por %p164, %p165
    %p167 = scmp.ne.s32.totalorder %s158, %s159
    %p168 = scmp.eq.s32.totalorder %s22, 0
    %p169 = por %p167, %p168
    %p170 = scmp.ne.s32.totalorder %s158, %s159
    %p171 = scmp.eq.s32.totalorder %s23, 1
    %p172 = por %p170, %p171
    %p174 = scmp.ne.s32.totalorder %s159, %s173
    %p175 = scmp.eq.s32.totalorder %s23, 0
    %p176 = por %p174, %p175
    %s178 = sadd.s32 %s177, 1
    %p181 = scmp.eq.s32.totalorder %s17, 1
    %p182 = scmp.ne.s32.totalorder %s177, %s179
    %p183 = scmp.eq.s32.totalorder %s17, 0
    %p184 = por %p182, %p183
    %p185 = scmp.ne.s32.totalorder %s177, %s179
    %p186 = scmp.eq.s32.totalorder %s22, 1
    %p187 = por %p185, %p186
    %p188 = scmp.ne.s32.totalorder %s179, %s180
    %p189 = scmp.eq.s32.totalorder %s22, 0
    %p190 = por %p188, %p189
    %p191 = scmp.ne.s32.totalorder %s179, %s180
    %p192 = scmp.eq.s32.totalorder %s23, 1
    %p193 = por %p191, %p192
    %p195 = scmp.ne.s32.totalorder %s180, %s194
    %p196 = scmp.eq.s32.totalorder %s23, 0
    %p197 = por %p195, %p196
    %s199 = sadd.s32 %s198, 1
    %p202 = scmp.eq.s32.totalorder %s17, 1
    %p203 = scmp.ne.s32.totalorder %s198, %s200
    %p204 = scmp.eq.s32.totalorder %s17, 0
    %p205 = por %p203, %p204
    %p206 = scmp.ne.s32.totalorder %s198, %s200
    %p207 = scmp.eq.s32.totalorder %s22, 1
    %p208 = por %p206, %p207
    %p209 = scmp.ne.s32.totalorder %s200, %s201
    %p210 = scmp.eq.s32.totalorder %s22, 0
    %p211 = por %p209, %p210
    %p212 = scmp.ne.s32.totalorder %s200, %s201
    %p213 = scmp.eq.s32.totalorder %s23, 1
    %p214 = por %p212, %p213
    %p216 = scmp.ne.s32.totalorder %s201, %s215
    %p217 = scmp.eq.s32.totalorder %s23, 0
    %p218 = por %p216, %p217
    %s220 = sadd.s32 %s219, 1
    %p223 = scmp.eq.s32.totalorder %s17, 1
    %p224 = scmp.ne.s32.totalorder %s219, %s221
    %p225 = scmp.eq.s32.totalorder %s17, 0
    %p226 = por %p224, %p225
    %p227 = scmp.ne.s32.totalorder %s219, %s221
    %p228 = scmp.eq.s32.totalorder %s22, 1
    %p229 = por %p227, %p228
    %p230 = scmp.ne.s32.totalorder %s221, %s222
    %p231 = scmp.eq.s32.totalorder %s22, 0
    %p232 = por %p230, %p231
    %p233 = scmp.ne.s32.totalorder %s221, %s222
    %p234 = scmp.eq.s32.totalorder %s23, 1
    %p235 = por %p233, %p234
    %p237 = scmp.ne.s32.totalorder %s222, %s236
    %p238 = scmp.eq.s32.totalorder %s23, 0
    %p239 = por %p237, %p238
    %s241 = sadd.s32 %s240, 1
    %p244 = scmp.eq.s32.totalorder %s17, 1
    %p245 = scmp.ne.s32.totalorder %s240, %s242
    %p246 = scmp.eq.s32.totalorder %s17, 0
    %p247 = por %p245, %p246
    %p248 = scmp.ne.s32.totalorder %s240, %s242
    %p249 = scmp.eq.s32.totalorder %s22, 1
    %p250 = por %p248, %p249
    %p251 = scmp.ne.s32.totalorder %s242, %s243
    %p252 = scmp.eq.s32.totalorder %s22, 0
    %p253 = por %p251, %p252
    %p254 = scmp.ne.s32.totalorder %s242, %s243
    %p255 = scmp.eq.s32.totalorder %s23, 1
    %p256 = por %p254, %p255
    %p258 = scmp.ne.s32.totalorder %s243, %s257
    %p259 = scmp.eq.s32.totalorder %s23, 0
    %p260 = por %p258, %p259
    %s261 = ssub.s32 %s17, %s24
    %p262 = scmp.eq.s32.totalorder %s261, 0
    %s264 = sadd.s32 %s263, 1
    %s265 = scalar_select %p262, %s263, %s264
    %p268 = pneg %p262
    %p269 = scmp.eq.s32.totalorder %s17, 1
    %p270 = por %p268, %p269
    %p271 = scmp.ne.s32.totalorder %s263, %s266
    %p272 = scmp.eq.s32.totalorder %s17, 0
    %p273 = por %p271, %p272
    %p274 = scmp.ne.s32.totalorder %s263, %s266
    %p275 = scmp.eq.s32.totalorder %s22, 1
    %p276 = por %p274, %p275
    %p277 = scmp.ne.s32.totalorder %s266, %s267
    %p278 = scmp.eq.s32.totalorder %s22, 0
    %p279 = por %p277, %p278
    %p280 = scmp.ne.s32.totalorder %s266, %s267
    %p281 = scmp.eq.s32.totalorder %s23, 1
    %p282 = por %p280, %p281
    %p284 = scmp.ne.s32.totalorder %s267, %s283
    %p285 = scmp.eq.s32.totalorder %s23, 0
    %p286 = por %p284, %p285
    %p287 = scmp.le.s32.totalorder 1, %s17
    %p288 = scmp.lt.s32.totalorder %s17, 3
    %p289 = pnand %p287, %p288
    %p290 = pneg %p289
    // Predicated region
    $region9: #{vit_block.1} parent=5 // pred_check
      _
    $region10: #{vit_block.1} parent=5 // pred_check_branch
      %292 = sbr.rel (%p289) target = $region12
    $region11: #{vit_block.1} parent=5 // pred_region
      %s293 = ssub.s32 %s17, 1
      // Predicated region
      $region13: #{vit_block.1} parent=11 // pred_check
        %p294 = pneg %p64
      $region14: #{vit_block.1} parent=11 // pred_check_branch
        %296 = sbr.rel (%p294) target = $region16
      $region15: #{vit_block.1} parent=11 // pred_region
        _
      $region16: #{vit_block.1} parent=11 // pred_fallthru
        _
      // Predicated region
      $region17: #{vit_block.1} parent=11 // pred_check
        %p297 = pneg %p85
      $region18: #{vit_block.1} parent=11 // pred_check_branch
        %299 = sbr.rel (%p297) target = $region20
      $region19: #{vit_block.1} parent=11 // pred_region
        _
      $region20: #{vit_block.1} parent=11 // pred_fallthru
        _
      // Predicated region
      $region21: #{vit_block.1} parent=11 // pred_check
        %p300 = pneg %p106
      $region22: #{vit_block.1} parent=11 // pred_check_branch
        %302 = sbr.rel (%p300) target = $region24
      $region23: #{vit_block.1} parent=11 // pred_region
        _
      $region24: #{vit_block.1} parent=11 // pred_fallthru
        _
      // Predicated region
      $region25: #{vit_block.1} parent=11 // pred_check
        %p303 = pneg %p127
      $region26: #{vit_block.1} parent=11 // pred_check_branch
        %305 = sbr.rel (%p303) target = $region28
      $region27: #{vit_block.1} parent=11 // pred_region
        _
      $region28: #{vit_block.1} parent=11 // pred_fallthru
        _
      // Predicated region
      $region29: #{vit_block.1} parent=11 // pred_check
        %p306 = pneg %p148
      $region30: #{vit_block.1} parent=11 // pred_check_branch
        %308 = sbr.rel (%p306) target = $region32
      $region31: #{vit_block.1} parent=11 // pred_region
        _
      $region32: #{vit_block.1} parent=11 // pred_fallthru
        _
      // Predicated region
      $region33: #{vit_block.1} parent=11 // pred_check
        %p309 = pneg %p169
      $region34: #{vit_block.1} parent=11 // pred_check_branch
        %311 = sbr.rel (%p309) target = $region36
      $region35: #{vit_block.1} parent=11 // pred_region
        _
      $region36: #{vit_block.1} parent=11 // pred_fallthru
        _
      // Predicated region
      $region37: #{vit_block.1} parent=11 // pred_check
        %p312 = pneg %p190
      $region38: #{vit_block.1} parent=11 // pred_check_branch
        %314 = sbr.rel (%p312) target = $region40
      $region39: #{vit_block.1} parent=11 // pred_region
        _
      $region40: #{vit_block.1} parent=11 // pred_fallthru
        _
      // Predicated region
      $region41: #{vit_block.1} parent=11 // pred_check
        %p315 = pneg %p211
      $region42: #{vit_block.1} parent=11 // pred_check_branch
        %317 = sbr.rel (%p315) target = $region44
      $region43: #{vit_block.1} parent=11 // pred_region
        _
      $region44: #{vit_block.1} parent=11 // pred_fallthru
        _
      // Predicated region
      $region45: #{vit_block.1} parent=11 // pred_check
        %p318 = pneg %p232
      $region46: #{vit_block.1} parent=11 // pred_check_branch
        %320 = sbr.rel (%p318) target = $region48
      $region47: #{vit_block.1} parent=11 // pred_region
        _
      $region48: #{vit_block.1} parent=11 // pred_fallthru
        _
      // Predicated region
      $region49: #{vit_block.1} parent=11 // pred_check
        %p321 = pneg %p253
      $region50: #{vit_block.1} parent=11 // pred_check_branch
        %323 = sbr.rel (%p321) target = $region52
      $region51: #{vit_block.1} parent=11 // pred_region
        _
      $region52: #{vit_block.1} parent=11 // pred_fallthru
        _
    $region12: #{vit_block.1} parent=5 // pred_fallthru
      _
    %p324 = scmp.lt.s32.totalorder %s17, 2
    // Predicated region
    $region53: #{vit_block.1} parent=5 // pred_check
      %p325 = pneg %p324
    $region54: #{vit_block.1} parent=5 // pred_check_branch
      %327 = sbr.rel (%p325) target = $region56
    $region55: #{vit_block.1} parent=5 // pred_region
      // Predicated region
      $region57: #{vit_block.1} parent=55 // pred_check
        %p328 = pneg %p37
      $region58: #{vit_block.1} parent=55 // pred_check_branch
        %330 = sbr.rel (%p328) target = $region60
      $region59: #{vit_block.1} parent=55 // pred_region
        %p331 = scmp.lt.s32.totalorder %s17, 1
        %s332 = scalar_select %p331, %s17, 1
        %s333 = smul.addr %s332, 8
        %s334 = scalar_lea.vmem %s0, %s333
      $region60: #{vit_block.1} parent=55 // pred_fallthru
        _
    $region56: #{vit_block.1} parent=5 // pred_fallthru
      _
    %p335 = scmp.le.s32.totalorder 1, %s17
    %p336 = scmp.lt.s32.totalorder %s17, 3
    %p337 = pnand %p335, %p336
    %p338 = pneg %p337
    // Predicated region
    $region61: #{vit_block.1} parent=5 // pred_check
      _
    $region62: #{vit_block.1} parent=5 // pred_check_branch
      %340 = sbr.rel (%p337) target = $region64
    $region63: #{vit_block.1} parent=5 // pred_region
      %s341 = ssub.s32 %s17, 1
      %p342 = scmp.lt.s32.totalorder %s22, 1
      %s343 = scalar_select %p342, %s22, 1
      %s344 = smul.addr %s343, 8
      %s345 = scalar_lea.vmem %s0, %s344
      %p346 = pneg %p43
      %p347 = pneg %p40
      %p348 = pneg %p64
      %p349 = pneg %p61
      %p350 = pneg %p85
      %p351 = pneg %p82
      %p352 = pneg %p106
      %p353 = pneg %p103
      %p354 = pneg %p127
      %p355 = pneg %p124
      %p356 = pneg %p148
      %p357 = pneg %p145
      %p358 = pneg %p169
      %p359 = pneg %p166
      %p360 = pneg %p190
      %p361 = pneg %p187
      %p362 = pneg %p211
      %p363 = pneg %p208
      %p364 = pneg %p232
      %p365 = pneg %p229
      %p366 = pneg %p253
      %p367 = pneg %p250
      %p368 = pneg %p279
      %p369 = pneg %p276
      %p370 = scmp.lt.s32.totalorder %s22, 1
      %s371 = scalar_select %p370, %s22, 1
      %s372 = smul.addr %s371, 8
      %s373 = scalar_lea.vmem %s11, %s372
      %p374 = scmp.lt.s32.totalorder %s22, 1
      %s375 = scalar_select %p374, %s22, 1
      %s376 = smul.addr %s375, 8
      %s377 = scalar_lea.vmem %s0, %s376
      %p378 = scmp.lt.s32.totalorder %s22, 1
      %s379 = scalar_select %p378, %s22, 1
      %s380 = smul.addr %s379, 8
      %s381 = scalar_lea.vmem %s11, %s380
      %v382 = vld [vmem:[%s377] sm:$0xff]
      %v383 = vld [vmem:[%s1] sm:$0x1]
      %v384 = vld [vmem:[%s2] sm:$0x1]
      %vm385 = vcmask 261120
      %v386 = vsel %vm385, %v382, 0.0
      %387 = vadd.xlane.f32.xlu0 %v386
      %v388 = vpop.xlane.xlu0 %387
      %v389 = vrcp.pop 32.0
      %v390 = vmul.f32 %v388, %v389
      %v391 = vsub.f32 %v382, %v390
      %v392 = vmul.f32 %v391, %v391
      %v393 = vsel %vm385, %v392, 0.0
      %394 = vadd.xlane.f32.xlu0 %v393
      %v395 = vpop.xlane.xlu0 %394
      %v396 = vmul.f32 %v395, %v389
      %v397 = vadd.f32 %v396, 1e-05
      %v398 = vrsqrt.pop %v397
      %v399 = vmul.f32 %v391, %v398
      %v401 = vlaneseq
      %v402 = vshrl.u32 %v401, 7
      %v403 = vsub.s32 0, %v402
      %v404 = vrot.slane %v383, %v403
      %v406 = vmul.f32 %v399, %v404
      %v408 = vlaneseq
      %v409 = vshrl.u32 %v408, 7
      %v410 = vsub.s32 0, %v409
      %v411 = vrot.slane %v384, %v410
      %v413 = vadd.f32 %v406, %v411
      %v414 = vld [vmem:[%s3] sm:$0xff]
      %v415 = vld [vmem:[%s3 + $0x8] sm:$0xff]
      %v416 = vld [vmem:[%s3 + $0x10] sm:$0xff]
      %v417 = vld [vmem:[%s3 + $0x18] sm:$0xff]
      %v419 = vsel %vm385, %v413, 0
      %421 = vmatprep.subr.mxu0 0.0
      %422 = vmatpush1.msra.mxu0 0.0
      %423 = vmatprep.subr.mxu0 0.0
      %424 = vmatpush1.msra.mxu0 0.0
      %425 = vmatprep.subr.mxu0 0.0
      %426 = vmatpush1.msra.mxu0 0.0
      %427 = vmatprep.subr.mxu0 0.0
      %428 = vmatpush1.msra.mxu0 0.0
      %429 = vmatprep.subr.mxu0 0.0
      %430 = vmatpush1.msra.mxu0 0.0
      %431 = vmatprep.subr.mxu0 0.0
      %432 = vmatpush1.msra.mxu0 0.0
      %433 = vmatprep.subr.mxu0 0.0
      %434 = vmatpush1.msra.mxu0 0.0
      %435 = vmatprep.subr.mxu0 0.0
      %436 = vmatpush1.msra.mxu0 0.0
      %437 = vmatprep.subr.mxu0 0.0
      %438 = vmatpush1.msra.mxu0 0.0
      %439 = vmatprep.subr.mxu0 0.0
      %440 = vmatpush1.msra.mxu0 0.0
      %441 = vmatprep.subr.mxu0 0.0
      %442 = vmatpush1.msra.mxu0 0.0
      %443 = vmatprep.subr.mxu0 0.0
      %444 = vmatpush1.msra.mxu0 0.0
      %445 = vmatprep.subr.mxu0 0.0
      %446 = vmatpush1.msra.mxu0 %v417
      %447 = vmatprep.subr.mxu0 0.0
      %448 = vmatpush1.msra.mxu0 %v416
      %449 = vmatprep.subr.mxu0 0.0
      %450 = vmatpush1.msra.mxu0 %v415
      %451 = vmatprep.subr.mxu0 0.0
      %452 = vmatpush1.msra.mxu0 %v414
      %453 = vmatprep.subr.mxu0 0.0
      %454 = vmatpush2.msra.mxu0 0.0
      %455 = vmatprep.subr.mxu0 0.0
      %456 = vmatpush2.msra.mxu0 0.0
      %457 = vmatprep.subr.mxu0 0.0
      %458 = vmatpush2.msra.mxu0 0.0
      %459 = vmatprep.subr.mxu0 0.0
      %460 = vmatpush2.msra.mxu0 0.0
      %461 = vmatprep.subr.mxu0 0.0
      %462 = vmatpush2.msra.mxu0 0.0
      %463 = vmatprep.subr.mxu0 0.0
      %464 = vmatpush2.msra.mxu0 0.0
      %465 = vmatprep.subr.mxu0 0.0
      %466 = vmatpush2.msra.mxu0 0.0
      %467 = vmatprep.subr.mxu0 0.0
      %468 = vmatpush2.msra.mxu0 0.0
      %469 = vmatprep.subr.mxu0 0.0
      %470 = vmatpush2.msra.mxu0 0.0
      %471 = vmatprep.subr.mxu0 0.0
      %472 = vmatpush2.msra.mxu0 0.0
      %473 = vmatprep.subr.mxu0 0.0
      %474 = vmatpush2.msra.mxu0 0.0
      %475 = vmatprep.subr.mxu0 0.0
      %476 = vmatpush2.msra.mxu0 0.0
      %477 = vmatprep.subr.mxu0 0.0
      %478 = vmatpush2.msra.mxu0 0.0
      %479 = vmatprep.subr.mxu0 0.0
      %480 = vmatpush2.msra.mxu0 0.0
      %481 = vmatprep.subr.mxu0 0.0
      %482 = vmatpush2.msra.mxu0 0.0
      %483 = vmatprep.subr.mxu0 0.0
      %484 = vmatpush2.msra.mxu0 0.0
      %485 = vmatprep.mubr.f32.mxu0 0.0
      %486 = vmatmul.mubr.f32.gmra.mxu0 %v419
      %v487 = vpop.f32.mrf.mxu0
      %v488 = vadd.f32 0.0, %v487
      %v489 = vpop.f32.mrf.mxu0
      %490 = vdwg.mxu0
      %v491 = vld [vmem:[%s4] sm:$0xff]
      %v492 = vld [vmem:[%s4 + $0x8] sm:$0xff]
      %v493 = vld [vmem:[%s4 + $0x10] sm:$0xff]
      %v494 = vld [vmem:[%s4 + $0x18] sm:$0xff]
      %496 = vrot.lane.b32.xlu0 %v488, 96
      %v497 = vpop.permute.xlu0 %496
      %vm498 = vcmask 64512
      %v499 = vsel %vm498, %v488, 0
      %v501 = vsel %vm498, %v497, 0
      %503 = vmatprep.subr.mxu0 0.0
      %504 = vmatpush1.xpose.msra.mxu0 0.0
      %505 = vmatprep.subr.mxu0 0.0
      %506 = vmatpush1.xpose.msra.mxu0 0.0
      %507 = vmatprep.subr.mxu0 0.0
      %508 = vmatpush1.xpose.msra.mxu0 0.0
      %509 = vmatprep.subr.mxu0 0.0
      %510 = vmatpush1.xpose.msra.mxu0 0.0
      %511 = vmatprep.subr.mxu0 0.0
      %512 = vmatpush1.xpose.msra.mxu0 0.0
      %513 = vmatprep.subr.mxu0 0.0
      %514 = vmatpush1.xpose.msra.mxu0 0.0
      %515 = vmatprep.subr.mxu0 0.0
      %516 = vmatpush1.xpose.msra.mxu0 0.0
      %517 = vmatprep.subr.mxu0 0.0
      %518 = vmatpush1.xpose.msra.mxu0 0.0
      %519 = vmatprep.subr.mxu0 0.0
      %520 = vmatpush1.xpose.msra.mxu0 0.0
      %521 = vmatprep.subr.mxu0 0.0
      %522 = vmatpush1.xpose.msra.mxu0 0.0
      %523 = vmatprep.subr.mxu0 0.0
      %524 = vmatpush1.xpose.msra.mxu0 0.0
      %525 = vmatprep.subr.mxu0 0.0
      %526 = vmatpush1.xpose.msra.mxu0 0.0
      %527 = vmatprep.subr.mxu0 0.0
      %528 = vmatpush1.xpose.msra.mxu0 0.0
      %529 = vmatprep.subr.mxu0 0.0
      %530 = vmatpush1.xpose.msra.mxu0 0.0
      %531 = vmatprep.subr.mxu0 0.0
      %532 = vmatpush1.xpose.msra.mxu0 0.0
      %533 = vmatprep.subr.mxu0 0.0
      %534 = vmatpush1.xpose.msra.mxu0 %v501
      %535 = vmatprep.subr.mxu0 0.0
      %536 = vmatpush2.xpose.msra.mxu0 0.0
      %537 = vmatprep.subr.mxu0 0.0
      %538 = vmatpush2.xpose.msra.mxu0 0.0
      %539 = vmatprep.subr.mxu0 0.0
      %540 = vmatpush2.xpose.msra.mxu0 0.0
      %541 = vmatprep.subr.mxu0 0.0
      %542 = vmatpush2.xpose.msra.mxu0 0.0
      %543 = vmatprep.subr.mxu0 0.0
      %544 = vmatpush2.xpose.msra.mxu0 0.0
      %545 = vmatprep.subr.mxu0 0.0
      %546 = vmatpush2.xpose.msra.mxu0 0.0
      %547 = vmatprep.subr.mxu0 0.0
      %548 = vmatpush2.xpose.msra.mxu0 0.0
      %549 = vmatprep.subr.mxu0 0.0
      %550 = vmatpush2.xpose.msra.mxu0 0.0
      %551 = vmatprep.subr.mxu0 0.0
      %552 = vmatpush2.xpose.msra.mxu0 0.0
      %553 = vmatprep.subr.mxu0 0.0
      %554 = vmatpush2.xpose.msra.mxu0 0.0
      %555 = vmatprep.subr.mxu0 0.0
      %556 = vmatpush2.xpose.msra.mxu0 0.0
      %557 = vmatprep.subr.mxu0 0.0
      %558 = vmatpush2.xpose.msra.mxu0 0.0
      %559 = vmatprep.subr.mxu0 0.0
      %560 = vmatpush2.xpose.msra.mxu0 0.0
      %561 = vmatprep.subr.mxu0 0.0
      %562 = vmatpush2.xpose.msra.mxu0 0.0
      %563 = vmatprep.subr.mxu0 0.0
      %564 = vmatpush2.xpose.msra.mxu0 0.0
      %565 = vmatprep.subr.mxu0 0.0
      %566 = vmatpush2.xpose.msra.mxu0 0.0
      %567 = vmatprep.mubr.f32.mxu0 0.0
      %568 = vmatmul.mubr.f32.gmra.mxu0 %v499
      %v569 = vpop.f32.mrf.mxu0
      %v570 = vadd.f32 0.0, %v569
      %v571 = vpop.f32.mrf.mxu0
      %572 = vdwg.mxu0
      %v573 = vsel %vm498, %v570, -inf
      %574 = vmax.xlane.f32.xlu0 %v573
      %v575 = vpop.xlane.xlu0 %574
      %v576 = vsub.f32 %v570, %v575
      %v577 = vmul.f32 %v576, 1.442695
      %v578 = vpow.pop %v577
      %v579 = vsel %vm498, %v578, 0.0
      %580 = vadd.xlane.f32.xlu0 %v579
      %v581 = vpop.xlane.xlu0 %580
      %v582 = vrcp.pop %v581
      %v583 = vmul.f32 %v578, %v582
      %584 = vrot.lane.b32.xlu0 %v488, 64
      %v585 = vpop.permute.xlu0 %584
      %v588 = vsel %vm498, %v583, 0
      %590 = vmatprep.subr.mxu0 0.0
      %591 = vmatpush1.msra.mxu0 0.0
      %592 = vmatprep.subr.mxu0 0.0
      %593 = vmatpush1.msra.mxu0 0.0
      %594 = vmatprep.subr.mxu0 0.0
      %595 = vmatpush1.msra.mxu0 0.0
      %596 = vmatprep.subr.mxu0 0.0
      %597 = vmatpush1.msra.mxu0 0.0
      %598 = vmatprep.subr.mxu0 0.0
      %599 = vmatpush1.msra.mxu0 0.0
      %600 = vmatprep.subr.mxu0 0.0
      %601 = vmatpush1.msra.mxu0 0.0
      %602 = vmatprep.subr.mxu0 0.0
      %603 = vmatpush1.msra.mxu0 0.0
      %604 = vmatprep.subr.mxu0 0.0
      %605 = vmatpush1.msra.mxu0 0.0
      %606 = vmatprep.subr.mxu0 0.0
      %607 = vmatpush1.msra.mxu0 0.0
      %608 = vmatprep.subr.mxu0 0.0
      %609 = vmatpush1.msra.mxu0 0.0
      %610 = vmatprep.subr.mxu0 0.0
      %611 = vmatpush1.msra.mxu0 0.0
      %612 = vmatprep.subr.mxu0 0.0
      %613 = vmatpush1.msra.mxu0 0.0
      %614 = vmatprep.subr.mxu0 0.0
      %615 = vmatpush1.msra.mxu0 0.0
      %616 = vmatprep.subr.mxu0 0.0
      %617 = vmatpush1.msra.mxu0 0.0
      %618 = vmatprep.subr.mxu0 0.0
      %619 = vmatpush1.msra.mxu0 0.0
      %620 = vmatprep.subr.mxu0 0.0
      %621 = vmatpush1.msra.mxu0 %v585
      %622 = vmatprep.subr.mxu0 0.0
      %623 = vmatpush2.msra.mxu0 0.0
      %624 = vmatprep.subr.mxu0 0.0
      %625 = vmatpush2.msra.mxu0 0.0
      %626 = vmatprep.subr.mxu0 0.0
      %627 = vmatpush2.msra.mxu0 0.0
      %628 = vmatprep.subr.mxu0 0.0
      %629 = vmatpush2.msra.mxu0 0.0
      %630 = vmatprep.subr.mxu0 0.0
      %631 = vmatpush2.msra.mxu0 0.0
      %632 = vmatprep.subr.mxu0 0.0
      %633 = vmatpush2.msra.mxu0 0.0
      %634 = vmatprep.subr.mxu0 0.0
      %635 = vmatpush2.msra.mxu0 0.0
      %636 = vmatprep.subr.mxu0 0.0
      %637 = vmatpush2.msra.mxu0 0.0
      %638 = vmatprep.subr.mxu0 0.0
      %639 = vmatpush2.msra.mxu0 0.0
      %640 = vmatprep.subr.mxu0 0.0
      %641 = vmatpush2.msra.mxu0 0.0
      %642 = vmatprep.subr.mxu0 0.0
      %643 = vmatpush2.msra.mxu0 0.0
      %644 = vmatprep.subr.mxu0 0.0
      %645 = vmatpush2.msra.mxu0 0.0
      %646 = vmatprep.subr.mxu0 0.0
      %647 = vmatpush2.msra.mxu0 0.0
      %648 = vmatprep.subr.mxu0 0.0
      %649 = vmatpush2.msra.mxu0 0.0
      %650 = vmatprep.subr.mxu0 0.0
      %651 = vmatpush2.msra.mxu0 0.0
      %652 = vmatprep.subr.mxu0 0.0
      %653 = vmatpush2.msra.mxu0 0.0
      %654 = vmatprep.mubr.f32.mxu0 0.0
      %655 = vmatmul.mubr.f32.gmra.mxu0 %v588
      %v656 = vpop.f32.mrf.mxu0
      %v657 = vadd.f32 0.0, %v656
      %v658 = vpop.f32.mrf.mxu0
      %659 = vdwg.mxu0
      %660 = vrot.lane.b32.xlu0 %v488, 120
      %v661 = vpop.permute.xlu0 %660
      %662 = vrot.lane.b32.xlu0 %v488, 88
      %v663 = vpop.permute.xlu0 %662
      %v664 = vsel %vm498, %v661, 0
      %v666 = vsel %vm498, %v663, 0
      %668 = vmatprep.subr.mxu0 0.0
      %669 = vmatpush1.xpose.msra.mxu0 0.0
      %670 = vmatprep.subr.mxu0 0.0
      %671 = vmatpush1.xpose.msra.mxu0 0.0
      %672 = vmatprep.subr.mxu0 0.0
      %673 = vmatpush1.xpose.msra.mxu0 0.0
      %674 = vmatprep.subr.mxu0 0.0
      %675 = vmatpush1.xpose.msra.mxu0 0.0
      %676 = vmatprep.subr.mxu0 0.0
      %677 = vmatpush1.xpose.msra.mxu0 0.0
      %678 = vmatprep.subr.mxu0 0.0
      %679 = vmatpush1.xpose.msra.mxu0 0.0
      %680 = vmatprep.subr.mxu0 0.0
      %681 = vmatpush1.xpose.msra.mxu0 0.0
      %682 = vmatprep.subr.mxu0 0.0
      %683 = vmatpush1.xpose.msra.mxu0 0.0
      %684 = vmatprep.subr.mxu0 0.0
      %685 = vmatpush1.xpose.msra.mxu0 0.0
      %686 = vmatprep.subr.mxu0 0.0
      %687 = vmatpush1.xpose.msra.mxu0 0.0
      %688 = vmatprep.subr.mxu0 0.0
      %689 = vmatpush1.xpose.msra.mxu0 0.0
      %690 = vmatprep.subr.mxu0 0.0
      %691 = vmatpush1.xpose.msra.mxu0 0.0
      %692 = vmatprep.subr.mxu0 0.0
      %693 = vmatpush1.xpose.msra.mxu0 0.0
      %694 = vmatprep.subr.mxu0 0.0
      %695 = vmatpush1.xpose.msra.mxu0 0.0
      %696 = vmatprep.subr.mxu0 0.0
      %697 = vmatpush1.xpose.msra.mxu0 0.0
      %698 = vmatprep.subr.mxu0 0.0
      %699 = vmatpush1.xpose.msra.mxu0 %v666
      %700 = vmatprep.subr.mxu0 0.0
      %701 = vmatpush2.xpose.msra.mxu0 0.0
      %702 = vmatprep.subr.mxu0 0.0
      %703 = vmatpush2.xpose.msra.mxu0 0.0
      %704 = vmatprep.subr.mxu0 0.0
      %705 = vmatpush2.xpose.msra.mxu0 0.0
      %706 = vmatprep.subr.mxu0 0.0
      %707 = vmatpush2.xpose.msra.mxu0 0.0
      %708 = vmatprep.subr.mxu0 0.0
      %709 = vmatpush2.xpose.msra.mxu0 0.0
      %710 = vmatprep.subr.mxu0 0.0
      %711 = vmatpush2.xpose.msra.mxu0 0.0
      %712 = vmatprep.subr.mxu0 0.0
      %713 = vmatpush2.xpose.msra.mxu0 0.0
      %714 = vmatprep.subr.mxu0 0.0
      %715 = vmatpush2.xpose.msra.mxu0 0.0
      %716 = vmatprep.subr.mxu0 0.0
      %717 = vmatpush2.xpose.msra.mxu0 0.0
      %718 = vmatprep.subr.mxu0 0.0
      %719 = vmatpush2.xpose.msra.mxu0 0.0
      %720 = vmatprep.subr.mxu0 0.0
      %721 = vmatpush2.xpose.msra.mxu0 0.0
      %722 = vmatprep.subr.mxu0 0.0
      %723 = vmatpush2.xpose.msra.mxu0 0.0
      %724 = vmatprep.subr.mxu0 0.0
      %725 = vmatpush2.xpose.msra.mxu0 0.0
      %726 = vmatprep.subr.mxu0 0.0
      %727 = vmatpush2.xpose.msra.mxu0 0.0
      %728 = vmatprep.subr.mxu0 0.0
      %729 = vmatpush2.xpose.msra.mxu0 0.0
      %730 = vmatprep.subr.mxu0 0.0
      %731 = vmatpush2.xpose.msra.mxu0 0.0
      %732 = vmatprep.mubr.f32.mxu0 0.0
      %733 = vmatmul.mubr.f32.gmra.mxu0 %v664
      %v734 = vpop.f32.mrf.mxu0
      %v735 = vadd.f32 0.0, %v734
      %v736 = vpop.f32.mrf.mxu0
      %737 = vdwg.mxu0
      %v738 = vsel %vm498, %v735, -inf
      %739 = vmax.xlane.f32.xlu0 %v738
      %v740 = vpop.xlane.xlu0 %739
      %v741 = vsub.f32 %v735, %v740
      %v742 = vmul.f32 %v741, 1.442695
      %v743 = vpow.pop %v742
      %v744 = vsel %vm498, %v743, 0.0
      %745 = vadd.xlane.f32.xlu0 %v744
      %v746 = vpop.xlane.xlu0 %745
      %v747 = vrcp.pop %v746
      %v748 = vmul.f32 %v743, %v747
      %749 = vrot.lane.b32.xlu0 %v488, 56
      %v750 = vpop.permute.xlu0 %749
      %v753 = vsel %vm498, %v748, 0
      %755 = vmatprep.subr.mxu0 0.0
      %756 = vmatpush1.msra.mxu0 0.0
      %757 = vmatprep.subr.mxu0 0.0
      %758 = vmatpush1.msra.mxu0 0.0
      %759 = vmatprep.subr.mxu0 0.0
      %760 = vmatpush1.msra.mxu0 0.0
      %761 = vmatprep.subr.mxu0 0.0
      %762 = vmatpush1.msra.mxu0 0.0
      %763 = vmatprep.subr.mxu0 0.0
      %764 = vmatpush1.msra.mxu0 0.0
      %765 = vmatprep.subr.mxu0 0.0
      %766 = vmatpush1.msra.mxu0 0.0
      %767 = vmatprep.subr.mxu0 0.0
      %768 = vmatpush1.msra.mxu0 0.0
      %769 = vmatprep.subr.mxu0 0.0
      %770 = vmatpush1.msra.mxu0 0.0
      %771 = vmatprep.subr.mxu0 0.0
      %772 = vmatpush1.msra.mxu0 0.0
      %773 = vmatprep.subr.mxu0 0.0
      %774 = vmatpush1.msra.mxu0 0.0
      %775 = vmatprep.subr.mxu0 0.0
      %776 = vmatpush1.msra.mxu0 0.0
      %777 = vmatprep.subr.mxu0 0.0
      %778 = vmatpush1.msra.mxu0 0.0
      %779 = vmatprep.subr.mxu0 0.0
      %780 = vmatpush1.msra.mxu0 0.0
      %781 = vmatprep.subr.mxu0 0.0
      %782 = vmatpush1.msra.mxu0 0.0
      %783 = vmatprep.subr.mxu0 0.0
      %784 = vmatpush1.msra.mxu0 0.0
      %785 = vmatprep.subr.mxu0 0.0
      %786 = vmatpush1.msra.mxu0 %v750
      %787 = vmatprep.subr.mxu0 0.0
      %788 = vmatpush2.msra.mxu0 0.0
      %789 = vmatprep.subr.mxu0 0.0
      %790 = vmatpush2.msra.mxu0 0.0
      %791 = vmatprep.subr.mxu0 0.0
      %792 = vmatpush2.msra.mxu0 0.0
      %793 = vmatprep.subr.mxu0 0.0
      %794 = vmatpush2.msra.mxu0 0.0
      %795 = vmatprep.subr.mxu0 0.0
      %796 = vmatpush2.msra.mxu0 0.0
      %797 = vmatprep.subr.mxu0 0.0
      %798 = vmatpush2.msra.mxu0 0.0
      %799 = vmatprep.subr.mxu0 0.0
      %800 = vmatpush2.msra.mxu0 0.0
      %801 = vmatprep.subr.mxu0 0.0
      %802 = vmatpush2.msra.mxu0 0.0
      %803 = vmatprep.subr.mxu0 0.0
      %804 = vmatpush2.msra.mxu0 0.0
      %805 = vmatprep.subr.mxu0 0.0
      %806 = vmatpush2.msra.mxu0 0.0
      %807 = vmatprep.subr.mxu0 0.0
      %808 = vmatpush2.msra.mxu0 0.0
      %809 = vmatprep.subr.mxu0 0.0
      %810 = vmatpush2.msra.mxu0 0.0
      %811 = vmatprep.subr.mxu0 0.0
      %812 = vmatpush2.msra.mxu0 0.0
      %813 = vmatprep.subr.mxu0 0.0
      %814 = vmatpush2.msra.mxu0 0.0
      %815 = vmatprep.subr.mxu0 0.0
      %816 = vmatpush2.msra.mxu0 0.0
      %817 = vmatprep.subr.mxu0 0.0
      %818 = vmatpush2.msra.mxu0 0.0
      %819 = vmatprep.mubr.f32.mxu0 0.0
      %820 = vmatmul.mubr.f32.gmra.mxu0 %v753
      %v821 = vpop.f32.mrf.mxu0
      %v822 = vadd.f32 0.0, %v821
      %v823 = vpop.f32.mrf.mxu0
      %824 = vdwg.mxu0
      %v826 = vsel %vm498, %v822, 0
      %828 = vmatprep.subr.mxu0 0.0
      %829 = vmatpush1.msra.mxu0 0.0
      %830 = vmatprep.subr.mxu0 0.0
      %831 = vmatpush1.msra.mxu0 0.0
      %832 = vmatprep.subr.mxu0 0.0
      %833 = vmatpush1.msra.mxu0 0.0
      %834 = vmatprep.subr.mxu0 0.0
      %835 = vmatpush1.msra.mxu0 0.0
      %836 = vmatprep.subr.mxu0 0.0
      %837 = vmatpush1.msra.mxu0 0.0
      %838 = vmatprep.subr.mxu0 0.0
      %839 = vmatpush1.msra.mxu0 0.0
      %840 = vmatprep.subr.mxu0 0.0
      %841 = vmatpush1.msra.mxu0 0.0
      %842 = vmatprep.subr.mxu0 0.0
      %843 = vmatpush1.msra.mxu0 0.0
      %844 = vmatprep.subr.mxu0 0.0
      %845 = vmatpush1.msra.mxu0 0.0
      %846 = vmatprep.subr.mxu0 0.0
      %847 = vmatpush1.msra.mxu0 0.0
      %848 = vmatprep.subr.mxu0 0.0
      %849 = vmatpush1.msra.mxu0 0.0
      %850 = vmatprep.subr.mxu0 0.0
      %851 = vmatpush1.msra.mxu0 0.0
      %852 = vmatprep.subr.mxu0 0.0
      %853 = vmatpush1.msra.mxu0 0.0
      %854 = vmatprep.subr.mxu0 0.0
      %855 = vmatpush1.msra.mxu0 0.0
      %856 = vmatprep.subr.mxu0 0.0
      %857 = vmatpush1.msra.mxu0 0.0
      %858 = vmatprep.subr.mxu0 0.0
      %859 = vmatpush1.msra.mxu0 %v492
      %860 = vmatprep.subr.mxu0 0.0
      %861 = vmatpush2.msra.mxu0 0.0
      %862 = vmatprep.subr.mxu0 0.0
      %863 = vmatpush2.msra.mxu0 0.0
      %864 = vmatprep.subr.mxu0 0.0
      %865 = vmatpush2.msra.mxu0 0.0
      %866 = vmatprep.subr.mxu0 0.0
      %867 = vmatpush2.msra.mxu0 0.0
      %868 = vmatprep.subr.mxu0 0.0
      %869 = vmatpush2.msra.mxu0 0.0
      %870 = vmatprep.subr.mxu0 0.0
      %871 = vmatpush2.msra.mxu0 0.0
      %872 = vmatprep.subr.mxu0 0.0
      %873 = vmatpush2.msra.mxu0 0.0
      %874 = vmatprep.subr.mxu0 0.0
      %875 = vmatpush2.msra.mxu0 0.0
      %876 = vmatprep.subr.mxu0 0.0
      %877 = vmatpush2.msra.mxu0 0.0
      %878 = vmatprep.subr.mxu0 0.0
      %879 = vmatpush2.msra.mxu0 0.0
      %880 = vmatprep.subr.mxu0 0.0
      %881 = vmatpush2.msra.mxu0 0.0
      %882 = vmatprep.subr.mxu0 0.0
      %883 = vmatpush2.msra.mxu0 0.0
      %884 = vmatprep.subr.mxu0 0.0
      %885 = vmatpush2.msra.mxu0 0.0
      %886 = vmatprep.subr.mxu0 0.0
      %887 = vmatpush2.msra.mxu0 0.0
      %888 = vmatprep.subr.mxu0 0.0
      %889 = vmatpush2.msra.mxu0 0.0
      %890 = vmatprep.subr.mxu0 0.0
      %891 = vmatpush2.msra.mxu0 0.0
      %892 = vmatprep.mubr.f32.mxu0 0.0
      %893 = vmatmul.mubr.f32.gmra.mxu0 %v826
      %v894 = vpop.f32.mrf.mxu0
      %v895 = vadd.f32 0.0, %v894
      %v896 = vpop.f32.mrf.mxu0
      %897 = vdwg.mxu0
      %v899 = vsel %vm498, %v657, 0
      %901 = vmatprep.subr.mxu0 0.0
      %902 = vmatpush1.msra.mxu0 0.0
      %903 = vmatprep.subr.mxu0 0.0
      %904 = vmatpush1.msra.mxu0 0.0
      %905 = vmatprep.subr.mxu0 0.0
      %906 = vmatpush1.msra.mxu0 0.0
      %907 = vmatprep.subr.mxu0 0.0
      %908 = vmatpush1.msra.mxu0 0.0
      %909 = vmatprep.subr.mxu0 0.0
      %910 = vmatpush1.msra.mxu0 0.0
      %911 = vmatprep.subr.mxu0 0.0
      %912 = vmatpush1.msra.mxu0 0.0
      %913 = vmatprep.subr.mxu0 0.0
      %914 = vmatpush1.msra.mxu0 0.0
      %915 = vmatprep.subr.mxu0 0.0
      %916 = vmatpush1.msra.mxu0 0.0
      %917 = vmatprep.subr.mxu0 0.0
      %918 = vmatpush1.msra.mxu0 0.0
      %919 = vmatprep.subr.mxu0 0.0
      %920 = vmatpush1.msra.mxu0 0.0
      %921 = vmatprep.subr.mxu0 0.0
      %922 = vmatpush1.msra.mxu0 0.0
      %923 = vmatprep.subr.mxu0 0.0
      %924 = vmatpush1.msra.mxu0 0.0
      %925 = vmatprep.subr.mxu0 0.0
      %926 = vmatpush1.msra.mxu0 0.0
      %927 = vmatprep.subr.mxu0 0.0
      %928 = vmatpush1.msra.mxu0 0.0
      %929 = vmatprep.subr.mxu0 0.0
      %930 = vmatpush1.msra.mxu0 0.0
      %931 = vmatprep.subr.mxu0 0.0
      %932 = vmatpush1.msra.mxu0 %v491
      %933 = vmatprep.subr.mxu0 0.0
      %934 = vmatpush2.msra.mxu0 0.0
      %935 = vmatprep.subr.mxu0 0.0
      %936 = vmatpush2.msra.mxu0 0.0
      %937 = vmatprep.subr.mxu0 0.0
      %938 = vmatpush2.msra.mxu0 0.0
      %939 = vmatprep.subr.mxu0 0.0
      %940 = vmatpush2.msra.mxu0 0.0
      %941 = vmatprep.subr.mxu0 0.0
      %942 = vmatpush2.msra.mxu0 0.0
      %943 = vmatprep.subr.mxu0 0.0
      %944 = vmatpush2.msra.mxu0 0.0
      %945 = vmatprep.subr.mxu0 0.0
      %946 = vmatpush2.msra.mxu0 0.0
      %947 = vmatprep.subr.mxu0 0.0
      %948 = vmatpush2.msra.mxu0 0.0
      %949 = vmatprep.subr.mxu0 0.0
      %950 = vmatpush2.msra.mxu0 0.0
      %951 = vmatprep.subr.mxu0 0.0
      %952 = vmatpush2.msra.mxu0 0.0
      %953 = vmatprep.subr.mxu0 0.0
      %954 = vmatpush2.msra.mxu0 0.0
      %955 = vmatprep.subr.mxu0 0.0
      %956 = vmatpush2.msra.mxu0 0.0
      %957 = vmatprep.subr.mxu0 0.0
      %958 = vmatpush2.msra.mxu0 0.0
      %959 = vmatprep.subr.mxu0 0.0
      %960 = vmatpush2.msra.mxu0 0.0
      %961 = vmatprep.subr.mxu0 0.0
      %962 = vmatpush2.msra.mxu0 0.0
      %963 = vmatprep.subr.mxu0 0.0
      %964 = vmatpush2.msra.mxu0 0.0
      %965 = vmatprep.mubr.f32.mxu0 0.0
      %966 = vmatmul.mubr.f32.gmra.mxu0 %v899
      %v967 = vpop.f32.mrf.mxu0
      %v968 = vadd.f32 %v895, %v967
      %v969 = vpop.f32.mrf.mxu0
      %970 = vdwg.mxu0
      %971 = vrot.lane.b32.xlu0 %v488, 112
      %v972 = vpop.permute.xlu0 %971
      %973 = vrot.lane.b32.xlu0 %v488, 80
      %v974 = vpop.permute.xlu0 %973
      %v975 = vsel %vm498, %v972, 0
      %v977 = vsel %vm498, %v974, 0
      %979 = vmatprep.subr.mxu0 0.0
      %980 = vmatpush1.xpose.msra.mxu0 0.0
      %981 = vmatprep.subr.mxu0 0.0
      %982 = vmatpush1.xpose.msra.mxu0 0.0
      %983 = vmatprep.subr.mxu0 0.0
      %984 = vmatpush1.xpose.msra.mxu0 0.0
      %985 = vmatprep.subr.mxu0 0.0
      %986 = vmatpush1.xpose.msra.mxu0 0.0
      %987 = vmatprep.subr.mxu0 0.0
      %988 = vmatpush1.xpose.msra.mxu0 0.0
      %989 = vmatprep.subr.mxu0 0.0
      %990 = vmatpush1.xpose.msra.mxu0 0.0
      %991 = vmatprep.subr.mxu0 0.0
      %992 = vmatpush1.xpose.msra.mxu0 0.0
      %993 = vmatprep.subr.mxu0 0.0
      %994 = vmatpush1.xpose.msra.mxu0 0.0
      %995 = vmatprep.subr.mxu0 0.0
      %996 = vmatpush1.xpose.msra.mxu0 0.0
      %997 = vmatprep.subr.mxu0 0.0
      %998 = vmatpush1.xpose.msra.mxu0 0.0
      %999 = vmatprep.subr.mxu0 0.0
      %1000 = vmatpush1.xpose.msra.mxu0 0.0
      %1001 = vmatprep.subr.mxu0 0.0
      %1002 = vmatpush1.xpose.msra.mxu0 0.0
      %1003 = vmatprep.subr.mxu0 0.0
      %1004 = vmatpush1.xpose.msra.mxu0 0.0
      %1005 = vmatprep.subr.mxu0 0.0
      %1006 = vmatpush1.xpose.msra.mxu0 0.0
      %1007 = vmatprep.subr.mxu0 0.0
      %1008 = vmatpush1.xpose.msra.mxu0 0.0
      %1009 = vmatprep.subr.mxu0 0.0
      %1010 = vmatpush1.xpose.msra.mxu0 %v977
      %1011 = vmatprep.subr.mxu0 0.0
      %1012 = vmatpush2.xpose.msra.mxu0 0.0
      %1013 = vmatprep.subr.mxu0 0.0
      %1014 = vmatpush2.xpose.msra.mxu0 0.0
      %1015 = vmatprep.subr.mxu0 0.0
      %1016 = vmatpush2.xpose.msra.mxu0 0.0
      %1017 = vmatprep.subr.mxu0 0.0
      %1018 = vmatpush2.xpose.msra.mxu0 0.0
      %1019 = vmatprep.subr.mxu0 0.0
      %1020 = vmatpush2.xpose.msra.mxu0 0.0
      %1021 = vmatprep.subr.mxu0 0.0
      %1022 = vmatpush2.xpose.msra.mxu0 0.0
      %1023 = vmatprep.subr.mxu0 0.0
      %1024 = vmatpush2.xpose.msra.mxu0 0.0
      %1025 = vmatprep.subr.mxu0 0.0
      %1026 = vmatpush2.xpose.msra.mxu0 0.0
      %1027 = vmatprep.subr.mxu0 0.0
      %1028 = vmatpush2.xpose.msra.mxu0 0.0
      %1029 = vmatprep.subr.mxu0 0.0
      %1030 = vmatpush2.xpose.msra.mxu0 0.0
      %1031 = vmatprep.subr.mxu0 0.0
      %1032 = vmatpush2.xpose.msra.mxu0 0.0
      %1033 = vmatprep.subr.mxu0 0.0
      %1034 = vmatpush2.xpose.msra.mxu0 0.0
      %1035 = vmatprep.subr.mxu0 0.0
      %1036 = vmatpush2.xpose.msra.mxu0 0.0
      %1037 = vmatprep.subr.mxu0 0.0
      %1038 = vmatpush2.xpose.msra.mxu0 0.0
      %1039 = vmatprep.subr.mxu0 0.0
      %1040 = vmatpush2.xpose.msra.mxu0 0.0
      %1041 = vmatprep.subr.mxu0 0.0
      %1042 = vmatpush2.xpose.msra.mxu0 0.0
      %1043 = vmatprep.mubr.f32.mxu0 0.0
      %1044 = vmatmul.mubr.f32.gmra.mxu0 %v975
      %v1045 = vpop.f32.mrf.mxu0
      %v1046 = vadd.f32 0.0, %v1045
      %v1047 = vpop.f32.mrf.mxu0
      %1048 = vdwg.mxu0
      %v1049 = vsel %vm498, %v1046, -inf
      %1050 = vmax.xlane.f32.xlu0 %v1049
      %v1051 = vpop.xlane.xlu0 %1050
      %v1052 = vsub.f32 %v1046, %v1051
      %v1053 = vmul.f32 %v1052, 1.442695
      %v1054 = vpow.pop %v1053
      %v1055 = vsel %vm498, %v1054, 0.0
      %1056 = vadd.xlane.f32.xlu0 %v1055
      %v1057 = vpop.xlane.xlu0 %1056
      %v1058 = vrcp.pop %v1057
      %v1059 = vmul.f32 %v1054, %v1058
      %1060 = vrot.lane.b32.xlu0 %v488, 48
      %v1061 = vpop.permute.xlu0 %1060
      %v1064 = vsel %vm498, %v1059, 0
      %1066 = vmatprep.subr.mxu0 0.0
      %1067 = vmatpush1.msra.mxu0 0.0
      %1068 = vmatprep.subr.mxu0 0.0
      %1069 = vmatpush1.msra.mxu0 0.0
      %1070 = vmatprep.subr.mxu0 0.0
      %1071 = vmatpush1.msra.mxu0 0.0
      %1072 = vmatprep.subr.mxu0 0.0
      %1073 = vmatpush1.msra.mxu0 0.0
      %1074 = vmatprep.subr.mxu0 0.0
      %1075 = vmatpush1.msra.mxu0 0.0
      %1076 = vmatprep.subr.mxu0 0.0
      %1077 = vmatpush1.msra.mxu0 0.0
      %1078 = vmatprep.subr.mxu0 0.0
      %1079 = vmatpush1.msra.mxu0 0.0
      %1080 = vmatprep.subr.mxu0 0.0
      %1081 = vmatpush1.msra.mxu0 0.0
      %1082 = vmatprep.subr.mxu0 0.0
      %1083 = vmatpush1.msra.mxu0 0.0
      %1084 = vmatprep.subr.mxu0 0.0
      %1085 = vmatpush1.msra.mxu0 0.0
      %1086 = vmatprep.subr.mxu0 0.0
      %1087 = vmatpush1.msra.mxu0 0.0
      %1088 = vmatprep.subr.mxu0 0.0
      %1089 = vmatpush1.msra.mxu0 0.0
      %1090 = vmatprep.subr.mxu0 0.0
      %1091 = vmatpush1.msra.mxu0 0.0
      %1092 = vmatprep.subr.mxu0 0.0
      %1093 = vmatpush1.msra.mxu0 0.0
      %1094 = vmatprep.subr.mxu0 0.0
      %1095 = vmatpush1.msra.mxu0 0.0
      %1096 = vmatprep.subr.mxu0 0.0
      %1097 = vmatpush1.msra.mxu0 %v1061
      %1098 = vmatprep.subr.mxu0 0.0
      %1099 = vmatpush2.msra.mxu0 0.0
      %1100 = vmatprep.subr.mxu0 0.0
      %1101 = vmatpush2.msra.mxu0 0.0
      %1102 = vmatprep.subr.mxu0 0.0
      %1103 = vmatpush2.msra.mxu0 0.0
      %1104 = vmatprep.subr.mxu0 0.0
      %1105 = vmatpush2.msra.mxu0 0.0
      %1106 = vmatprep.subr.mxu0 0.0
      %1107 = vmatpush2.msra.mxu0 0.0
      %1108 = vmatprep.subr.mxu0 0.0
      %1109 = vmatpush2.msra.mxu0 0.0
      %1110 = vmatprep.subr.mxu0 0.0
      %1111 = vmatpush2.msra.mxu0 0.0
      %1112 = vmatprep.subr.mxu0 0.0
      %1113 = vmatpush2.msra.mxu0 0.0
      %1114 = vmatprep.subr.mxu0 0.0
      %1115 = vmatpush2.msra.mxu0 0.0
      %1116 = vmatprep.subr.mxu0 0.0
      %1117 = vmatpush2.msra.mxu0 0.0
      %1118 = vmatprep.subr.mxu0 0.0
      %1119 = vmatpush2.msra.mxu0 0.0
      %1120 = vmatprep.subr.mxu0 0.0
      %1121 = vmatpush2.msra.mxu0 0.0
      %1122 = vmatprep.subr.mxu0 0.0
      %1123 = vmatpush2.msra.mxu0 0.0
      %1124 = vmatprep.subr.mxu0 0.0
      %1125 = vmatpush2.msra.mxu0 0.0
      %1126 = vmatprep.subr.mxu0 0.0
      %1127 = vmatpush2.msra.mxu0 0.0
      %1128 = vmatprep.subr.mxu0 0.0
      %1129 = vmatpush2.msra.mxu0 0.0
      %1130 = vmatprep.mubr.f32.mxu0 0.0
      %1131 = vmatmul.mubr.f32.gmra.mxu0 %v1064
      %v1132 = vpop.f32.mrf.mxu0
      %v1133 = vadd.f32 0.0, %v1132
      %v1134 = vpop.f32.mrf.mxu0
      %1135 = vdwg.mxu0
      %v1137 = vsel %vm498, %v1133, 0
      %1139 = vmatprep.subr.mxu0 0.0
      %1140 = vmatpush1.msra.mxu0 0.0
      %1141 = vmatprep.subr.mxu0 0.0
      %1142 = vmatpush1.msra.mxu0 0.0
      %1143 = vmatprep.subr.mxu0 0.0
      %1144 = vmatpush1.msra.mxu0 0.0
      %1145 = vmatprep.subr.mxu0 0.0
      %1146 = vmatpush1.msra.mxu0 0.0
      %1147 = vmatprep.subr.mxu0 0.0
      %1148 = vmatpush1.msra.mxu0 0.0
      %1149 = vmatprep.subr.mxu0 0.0
      %1150 = vmatpush1.msra.mxu0 0.0
      %1151 = vmatprep.subr.mxu0 0.0
      %1152 = vmatpush1.msra.mxu0 0.0
      %1153 = vmatprep.subr.mxu0 0.0
      %1154 = vmatpush1.msra.mxu0 0.0
      %1155 = vmatprep.subr.mxu0 0.0
      %1156 = vmatpush1.msra.mxu0 0.0
      %1157 = vmatprep.subr.mxu0 0.0
      %1158 = vmatpush1.msra.mxu0 0.0
      %1159 = vmatprep.subr.mxu0 0.0
      %1160 = vmatpush1.msra.mxu0 0.0
      %1161 = vmatprep.subr.mxu0 0.0
      %1162 = vmatpush1.msra.mxu0 0.0
      %1163 = vmatprep.subr.mxu0 0.0
      %1164 = vmatpush1.msra.mxu0 0.0
      %1165 = vmatprep.subr.mxu0 0.0
      %1166 = vmatpush1.msra.mxu0 0.0
      %1167 = vmatprep.subr.mxu0 0.0
      %1168 = vmatpush1.msra.mxu0 0.0
      %1169 = vmatprep.subr.mxu0 0.0
      %1170 = vmatpush1.msra.mxu0 %v493
      %1171 = vmatprep.subr.mxu0 0.0
      %1172 = vmatpush2.msra.mxu0 0.0
      %1173 = vmatprep.subr.mxu0 0.0
      %1174 = vmatpush2.msra.mxu0 0.0
      %1175 = vmatprep.subr.mxu0 0.0
      %1176 = vmatpush2.msra.mxu0 0.0
      %1177 = vmatprep.subr.mxu0 0.0
      %1178 = vmatpush2.msra.mxu0 0.0
      %1179 = vmatprep.subr.mxu0 0.0
      %1180 = vmatpush2.msra.mxu0 0.0
      %1181 = vmatprep.subr.mxu0 0.0
      %1182 = vmatpush2.msra.mxu0 0.0
      %1183 = vmatprep.subr.mxu0 0.0
      %1184 = vmatpush2.msra.mxu0 0.0
      %1185 = vmatprep.subr.mxu0 0.0
      %1186 = vmatpush2.msra.mxu0 0.0
      %1187 = vmatprep.subr.mxu0 0.0
      %1188 = vmatpush2.msra.mxu0 0.0
      %1189 = vmatprep.subr.mxu0 0.0
      %1190 = vmatpush2.msra.mxu0 0.0
      %1191 = vmatprep.subr.mxu0 0.0
      %1192 = vmatpush2.msra.mxu0 0.0
      %1193 = vmatprep.subr.mxu0 0.0
      %1194 = vmatpush2.msra.mxu0 0.0
      %1195 = vmatprep.subr.mxu0 0.0
      %1196 = vmatpush2.msra.mxu0 0.0
      %1197 = vmatprep.subr.mxu0 0.0
      %1198 = vmatpush2.msra.mxu0 0.0
      %1199 = vmatprep.subr.mxu0 0.0
      %1200 = vmatpush2.msra.mxu0 0.0
      %1201 = vmatprep.subr.mxu0 0.0
      %1202 = vmatpush2.msra.mxu0 0.0
      %1203 = vmatprep.mubr.f32.mxu0 0.0
      %1204 = vmatmul.mubr.f32.gmra.mxu0 %v1137
      %v1205 = vpop.f32.mrf.mxu0
      %v1206 = vadd.f32 0.0, %v1205
      %v1207 = vpop.f32.mrf.mxu0
      %1208 = vdwg.mxu0
      %v1209 = vadd.f32 %v968, %v1206
      %1210 = vrot.lane.b32.xlu0 %v488, 104
      %v1211 = vpop.permute.xlu0 %1210
      %1212 = vrot.lane.b32.xlu0 %v488, 72
      %v1213 = vpop.permute.xlu0 %1212
      %v1214 = vsel %vm498, %v1211, 0
      %v1216 = vsel %vm498, %v1213, 0
      %1218 = vmatprep.subr.mxu0 0.0
      %1219 = vmatpush1.xpose.msra.mxu0 0.0
      %1220 = vmatprep.subr.mxu0 0.0
      %1221 = vmatpush1.xpose.msra.mxu0 0.0
      %1222 = vmatprep.subr.mxu0 0.0
      %1223 = vmatpush1.xpose.msra.mxu0 0.0
      %1224 = vmatprep.subr.mxu0 0.0
      %1225 = vmatpush1.xpose.msra.mxu0 0.0
      %1226 = vmatprep.subr.mxu0 0.0
      %1227 = vmatpush1.xpose.msra.mxu0 0.0
      %1228 = vmatprep.subr.mxu0 0.0
      %1229 = vmatpush1.xpose.msra.mxu0 0.0
      %1230 = vmatprep.subr.mxu0 0.0
      %1231 = vmatpush1.xpose.msra.mxu0 0.0
      %1232 = vmatprep.subr.mxu0 0.0
      %1233 = vmatpush1.xpose.msra.mxu0 0.0
      %1234 = vmatprep.subr.mxu0 0.0
      %1235 = vmatpush1.xpose.msra.mxu0 0.0
      %1236 = vmatprep.subr.mxu0 0.0
      %1237 = vmatpush1.xpose.msra.mxu0 0.0
      %1238 = vmatprep.subr.mxu0 0.0
      %1239 = vmatpush1.xpose.msra.mxu0 0.0
      %1240 = vmatprep.subr.mxu0 0.0
      %1241 = vmatpush1.xpose.msra.mxu0 0.0
      %1242 = vmatprep.subr.mxu0 0.0
      %1243 = vmatpush1.xpose.msra.mxu0 0.0
      %1244 = vmatprep.subr.mxu0 0.0
      %1245 = vmatpush1.xpose.msra.mxu0 0.0
      %1246 = vmatprep.subr.mxu0 0.0
      %1247 = vmatpush1.xpose.msra.mxu0 0.0
      %1248 = vmatprep.subr.mxu0 0.0
      %1249 = vmatpush1.xpose.msra.mxu0 %v1216
      %1250 = vmatprep.subr.mxu0 0.0
      %1251 = vmatpush2.xpose.msra.mxu0 0.0
      %1252 = vmatprep.subr.mxu0 0.0
      %1253 = vmatpush2.xpose.msra.mxu0 0.0
      %1254 = vmatprep.subr.mxu0 0.0
      %1255 = vmatpush2.xpose.msra.mxu0 0.0
      %1256 = vmatprep.subr.mxu0 0.0
      %1257 = vmatpush2.xpose.msra.mxu0 0.0
      %1258 = vmatprep.subr.mxu0 0.0
      %1259 = vmatpush2.xpose.msra.mxu0 0.0
      %1260 = vmatprep.subr.mxu0 0.0
      %1261 = vmatpush2.xpose.msra.mxu0 0.0
      %1262 = vmatprep.subr.mxu0 0.0
      %1263 = vmatpush2.xpose.msra.mxu0 0.0
      %1264 = vmatprep.subr.mxu0 0.0
      %1265 = vmatpush2.xpose.msra.mxu0 0.0
      %1266 = vmatprep.subr.mxu0 0.0
      %1267 = vmatpush2.xpose.msra.mxu0 0.0
      %1268 = vmatprep.subr.mxu0 0.0
      %1269 = vmatpush2.xpose.msra.mxu0 0.0
      %1270 = vmatprep.subr.mxu0 0.0
      %1271 = vmatpush2.xpose.msra.mxu0 0.0
      %1272 = vmatprep.subr.mxu0 0.0
      %1273 = vmatpush2.xpose.msra.mxu0 0.0
      %1274 = vmatprep.subr.mxu0 0.0
      %1275 = vmatpush2.xpose.msra.mxu0 0.0
      %1276 = vmatprep.subr.mxu0 0.0
      %1277 = vmatpush2.xpose.msra.mxu0 0.0
      %1278 = vmatprep.subr.mxu0 0.0
      %1279 = vmatpush2.xpose.msra.mxu0 0.0
      %1280 = vmatprep.subr.mxu0 0.0
      %1281 = vmatpush2.xpose.msra.mxu0 0.0
      %1282 = vmatprep.mubr.f32.mxu0 0.0
      %1283 = vmatmul.mubr.f32.gmra.mxu0 %v1214
      %v1284 = vpop.f32.mrf.mxu0
      %v1285 = vadd.f32 0.0, %v1284
      %v1286 = vpop.f32.mrf.mxu0
      %1287 = vdwg.mxu0
      %v1288 = vsel %vm498, %v1285, -inf
      %1289 = vmax.xlane.f32.xlu0 %v1288
      %v1290 = vpop.xlane.xlu0 %1289
      %v1291 = vsub.f32 %v1285, %v1290
      %v1292 = vmul.f32 %v1291, 1.442695
      %v1293 = vpow.pop %v1292
      %v1294 = vsel %vm498, %v1293, 0.0
      %1295 = vadd.xlane.f32.xlu0 %v1294
      %v1296 = vpop.xlane.xlu0 %1295
      %v1297 = vrcp.pop %v1296
      %v1298 = vmul.f32 %v1293, %v1297
      %1299 = vrot.lane.b32.xlu0 %v488, 40
      %v1300 = vpop.permute.xlu0 %1299
      %v1303 = vsel %vm498, %v1298, 0
      %1305 = vmatprep.subr.mxu0 0.0
      %1306 = vmatpush1.msra.mxu0 0.0
      %1307 = vmatprep.subr.mxu0 0.0
      %1308 = vmatpush1.msra.mxu0 0.0
      %1309 = vmatprep.subr.mxu0 0.0
      %1310 = vmatpush1.msra.mxu0 0.0
      %1311 = vmatprep.subr.mxu0 0.0
      %1312 = vmatpush1.msra.mxu0 0.0
      %1313 = vmatprep.subr.mxu0 0.0
      %1314 = vmatpush1.msra.mxu0 0.0
      %1315 = vmatprep.subr.mxu0 0.0
      %1316 = vmatpush1.msra.mxu0 0.0
      %1317 = vmatprep.subr.mxu0 0.0
      %1318 = vmatpush1.msra.mxu0 0.0
      %1319 = vmatprep.subr.mxu0 0.0
      %1320 = vmatpush1.msra.mxu0 0.0
      %1321 = vmatprep.subr.mxu0 0.0
      %1322 = vmatpush1.msra.mxu0 0.0
      %1323 = vmatprep.subr.mxu0 0.0
      %1324 = vmatpush1.msra.mxu0 0.0
      %1325 = vmatprep.subr.mxu0 0.0
      %1326 = vmatpush1.msra.mxu0 0.0
      %1327 = vmatprep.subr.mxu0 0.0
      %1328 = vmatpush1.msra.mxu0 0.0
      %1329 = vmatprep.subr.mxu0 0.0
      %1330 = vmatpush1.msra.mxu0 0.0
      %1331 = vmatprep.subr.mxu0 0.0
      %1332 = vmatpush1.msra.mxu0 0.0
      %1333 = vmatprep.subr.mxu0 0.0
      %1334 = vmatpush1.msra.mxu0 0.0
      %1335 = vmatprep.subr.mxu0 0.0
      %1336 = vmatpush1.msra.mxu0 %v1300
      %1337 = vmatprep.subr.mxu0 0.0
      %1338 = vmatpush2.msra.mxu0 0.0
      %1339 = vmatprep.subr.mxu0 0.0
      %1340 = vmatpush2.msra.mxu0 0.0
      %1341 = vmatprep.subr.mxu0 0.0
      %1342 = vmatpush2.msra.mxu0 0.0
      %1343 = vmatprep.subr.mxu0 0.0
      %1344 = vmatpush2.msra.mxu0 0.0
      %1345 = vmatprep.subr.mxu0 0.0
      %1346 = vmatpush2.msra.mxu0 0.0
      %1347 = vmatprep.subr.mxu0 0.0
      %1348 = vmatpush2.msra.mxu0 0.0
      %1349 = vmatprep.subr.mxu0 0.0
      %1350 = vmatpush2.msra.mxu0 0.0
      %1351 = vmatprep.subr.mxu0 0.0
      %1352 = vmatpush2.msra.mxu0 0.0
      %1353 = vmatprep.subr.mxu0 0.0
      %1354 = vmatpush2.msra.mxu0 0.0
      %1355 = vmatprep.subr.mxu0 0.0
      %1356 = vmatpush2.msra.mxu0 0.0
      %1357 = vmatprep.subr.mxu0 0.0
      %1358 = vmatpush2.msra.mxu0 0.0
      %1359 = vmatprep.subr.mxu0 0.0
      %1360 = vmatpush2.msra.mxu0 0.0
      %1361 = vmatprep.subr.mxu0 0.0
      %1362 = vmatpush2.msra.mxu0 0.0
      %1363 = vmatprep.subr.mxu0 0.0
      %1364 = vmatpush2.msra.mxu0 0.0
      %1365 = vmatprep.subr.mxu0 0.0
      %1366 = vmatpush2.msra.mxu0 0.0
      %1367 = vmatprep.subr.mxu0 0.0
      %1368 = vmatpush2.msra.mxu0 0.0
      %1369 = vmatprep.mubr.f32.mxu0 0.0
      %1370 = vmatmul.mubr.f32.gmra.mxu0 %v1303
      %v1371 = vpop.f32.mrf.mxu0
      %v1372 = vadd.f32 0.0, %v1371
      %v1373 = vpop.f32.mrf.mxu0
      %1374 = vdwg.mxu0
      %v1376 = vsel %vm498, %v1372, 0
      %1378 = vmatprep.subr.mxu0 0.0
      %1379 = vmatpush1.msra.mxu0 0.0
      %1380 = vmatprep.subr.mxu0 0.0
      %1381 = vmatpush1.msra.mxu0 0.0
      %1382 = vmatprep.subr.mxu0 0.0
      %1383 = vmatpush1.msra.mxu0 0.0
      %1384 = vmatprep.subr.mxu0 0.0
      %1385 = vmatpush1.msra.mxu0 0.0
      %1386 = vmatprep.subr.mxu0 0.0
      %1387 = vmatpush1.msra.mxu0 0.0
      %1388 = vmatprep.subr.mxu0 0.0
      %1389 = vmatpush1.msra.mxu0 0.0
      %1390 = vmatprep.subr.mxu0 0.0
      %1391 = vmatpush1.msra.mxu0 0.0
      %1392 = vmatprep.subr.mxu0 0.0
      %1393 = vmatpush1.msra.mxu0 0.0
      %1394 = vmatprep.subr.mxu0 0.0
      %1395 = vmatpush1.msra.mxu0 0.0
      %1396 = vmatprep.subr.mxu0 0.0
      %1397 = vmatpush1.msra.mxu0 0.0
      %1398 = vmatprep.subr.mxu0 0.0
      %1399 = vmatpush1.msra.mxu0 0.0
      %1400 = vmatprep.subr.mxu0 0.0
      %1401 = vmatpush1.msra.mxu0 0.0
      %1402 = vmatprep.subr.mxu0 0.0
      %1403 = vmatpush1.msra.mxu0 0.0
      %1404 = vmatprep.subr.mxu0 0.0
      %1405 = vmatpush1.msra.mxu0 0.0
      %1406 = vmatprep.subr.mxu0 0.0
      %1407 = vmatpush1.msra.mxu0 0.0
      %1408 = vmatprep.subr.mxu0 0.0
      %1409 = vmatpush1.msra.mxu0 %v494
      %1410 = vmatprep.subr.mxu0 0.0
      %1411 = vmatpush2.msra.mxu0 0.0
      %1412 = vmatprep.subr.mxu0 0.0
      %1413 = vmatpush2.msra.mxu0 0.0
      %1414 = vmatprep.subr.mxu0 0.0
      %1415 = vmatpush2.msra.mxu0 0.0
      %1416 = vmatprep.subr.mxu0 0.0
      %1417 = vmatpush2.msra.mxu0 0.0
      %1418 = vmatprep.subr.mxu0 0.0
      %1419 = vmatpush2.msra.mxu0 0.0
      %1420 = vmatprep.subr.mxu0 0.0
      %1421 = vmatpush2.msra.mxu0 0.0
      %1422 = vmatprep.subr.mxu0 0.0
      %1423 = vmatpush2.msra.mxu0 0.0
      %1424 = vmatprep.subr.mxu0 0.0
      %1425 = vmatpush2.msra.mxu0 0.0
      %1426 = vmatprep.subr.mxu0 0.0
      %1427 = vmatpush2.msra.mxu0 0.0
      %1428 = vmatprep.subr.mxu0 0.0
      %1429 = vmatpush2.msra.mxu0 0.0
      %1430 = vmatprep.subr.mxu0 0.0
      %1431 = vmatpush2.msra.mxu0 0.0
      %1432 = vmatprep.subr.mxu0 0.0
      %1433 = vmatpush2.msra.mxu0 0.0
      %1434 = vmatprep.subr.mxu0 0.0
      %1435 = vmatpush2.msra.mxu0 0.0
      %1436 = vmatprep.subr.mxu0 0.0
      %1437 = vmatpush2.msra.mxu0 0.0
      %1438 = vmatprep.subr.mxu0 0.0
      %1439 = vmatpush2.msra.mxu0 0.0
      %1440 = vmatprep.subr.mxu0 0.0
      %1441 = vmatpush2.msra.mxu0 0.0
      %1442 = vmatprep.mubr.f32.mxu0 0.0
      %1443 = vmatmul.mubr.f32.gmra.mxu0 %v1376
      %v1444 = vpop.f32.mrf.mxu0
      %v1445 = vadd.f32 0.0, %v1444
      %v1446 = vpop.f32.mrf.mxu0
      %1447 = vdwg.mxu0
      %v1448 = vadd.f32 %v1209, %v1445
      %v1449 = vadd.f32 %v413, %v1448
      %v1450 = vld [vmem:[%s5] sm:$0x1]
      %v1451 = vld [vmem:[%s6] sm:$0x1]
      %v1452 = vsel %vm385, %v1449, 0.0
      %1453 = vadd.xlane.f32.xlu0 %v1452
      %v1454 = vpop.xlane.xlu0 %1453
      %v1455 = vmul.f32 %v1454, %v389
      %v1456 = vsub.f32 %v1449, %v1455
      %v1457 = vmul.f32 %v1456, %v1456
      %v1458 = vsel %vm385, %v1457, 0.0
      %1459 = vadd.xlane.f32.xlu0 %v1458
      %v1460 = vpop.xlane.xlu0 %1459
      %v1461 = vmul.f32 %v1460, %v389
      %v1462 = vadd.f32 %v1461, 1e-05
      %v1463 = vrsqrt.pop %v1462
      %v1464 = vmul.f32 %v1456, %v1463
      %v1466 = vlaneseq
      %v1467 = vshrl.u32 %v1466, 7
      %v1468 = vsub.s32 0, %v1467
      %v1469 = vrot.slane %v1450, %v1468
      %v1471 = vmul.f32 %v1464, %v1469
      %v1473 = vlaneseq
      %v1474 = vshrl.u32 %v1473, 7
      %v1475 = vsub.s32 0, %v1474
      %v1476 = vrot.slane %v1451, %v1475
      %v1478 = vadd.f32 %v1471, %v1476
      %v1479 = vld [vmem:[%s7] sm:$0xff]
      %v1480 = vld [vmem:[%s7 + $0x8] sm:$0xff]
      %v1481 = vld [vmem:[%s7 + $0x10] sm:$0xff]
      %v1482 = vld [vmem:[%s7 + $0x18] sm:$0xff]
      %v1483 = vld [vmem:[%s8] sm:$0x1]
      %v1485 = vlaneseq
      %v1486 = vshrl.u32 %v1485, 7
      %v1487 = vsub.s32 0, %v1486
      %v1488 = vrot.slane %v1483, %v1487
      %v1491 = vsel %vm385, %v1478, 0
      %1493 = vmatprep.subr.mxu0 0.0
      %1494 = vmatpush1.msra.mxu0 0.0
      %1495 = vmatprep.subr.mxu0 0.0
      %1496 = vmatpush1.msra.mxu0 0.0
      %1497 = vmatprep.subr.mxu0 0.0
      %1498 = vmatpush1.msra.mxu0 0.0
      %1499 = vmatprep.subr.mxu0 0.0
      %1500 = vmatpush1.msra.mxu0 0.0
      %1501 = vmatprep.subr.mxu0 0.0
      %1502 = vmatpush1.msra.mxu0 0.0
      %1503 = vmatprep.subr.mxu0 0.0
      %1504 = vmatpush1.msra.mxu0 0.0
      %1505 = vmatprep.subr.mxu0 0.0
      %1506 = vmatpush1.msra.mxu0 0.0
      %1507 = vmatprep.subr.mxu0 0.0
      %1508 = vmatpush1.msra.mxu0 0.0
      %1509 = vmatprep.subr.mxu0 0.0
      %1510 = vmatpush1.msra.mxu0 0.0
      %1511 = vmatprep.subr.mxu0 0.0
      %1512 = vmatpush1.msra.mxu0 0.0
      %1513 = vmatprep.subr.mxu0 0.0
      %1514 = vmatpush1.msra.mxu0 0.0
      %1515 = vmatprep.subr.mxu0 0.0
      %1516 = vmatpush1.msra.mxu0 0.0
      %1517 = vmatprep.subr.mxu0 0.0
      %1518 = vmatpush1.msra.mxu0 %v1482
      %1519 = vmatprep.subr.mxu0 0.0
      %1520 = vmatpush1.msra.mxu0 %v1481
      %1521 = vmatprep.subr.mxu0 0.0
      %1522 = vmatpush1.msra.mxu0 %v1480
      %1523 = vmatprep.subr.mxu0 0.0
      %1524 = vmatpush1.msra.mxu0 %v1479
      %1525 = vmatprep.subr.mxu0 0.0
      %1526 = vmatpush2.msra.mxu0 0.0
      %1527 = vmatprep.subr.mxu0 0.0
      %1528 = vmatpush2.msra.mxu0 0.0
      %1529 = vmatprep.subr.mxu0 0.0
      %1530 = vmatpush2.msra.mxu0 0.0
      %1531 = vmatprep.subr.mxu0 0.0
      %1532 = vmatpush2.msra.mxu0 0.0
      %1533 = vmatprep.subr.mxu0 0.0
      %1534 = vmatpush2.msra.mxu0 0.0
      %1535 = vmatprep.subr.mxu0 0.0
      %1536 = vmatpush2.msra.mxu0 0.0
      %1537 = vmatprep.subr.mxu0 0.0
      %1538 = vmatpush2.msra.mxu0 0.0
      %1539 = vmatprep.subr.mxu0 0.0
      %1540 = vmatpush2.msra.mxu0 0.0
      %1541 = vmatprep.subr.mxu0 0.0
      %1542 = vmatpush2.msra.mxu0 0.0
      %1543 = vmatprep.subr.mxu0 0.0
      %1544 = vmatpush2.msra.mxu0 0.0
      %1545 = vmatprep.subr.mxu0 0.0
      %1546 = vmatpush2.msra.mxu0 0.0
      %1547 = vmatprep.subr.mxu0 0.0
      %1548 = vmatpush2.msra.mxu0 0.0
      %1549 = vmatprep.subr.mxu0 0.0
      %1550 = vmatpush2.msra.mxu0 0.0
      %1551 = vmatprep.subr.mxu0 0.0
      %1552 = vmatpush2.msra.mxu0 0.0
      %1553 = vmatprep.subr.mxu0 0.0
      %1554 = vmatpush2.msra.mxu0 0.0
      %1555 = vmatprep.subr.mxu0 0.0
      %1556 = vmatpush2.msra.mxu0 0.0
      %1557 = vmatprep.mubr.f32.mxu0 0.0
      %1558 = vmatmul.mubr.f32.gmra.mxu0 %v1491
      %v1559 = vpop.f32.mrf.mxu0
      %v1560 = vadd.f32 %v1488, %v1559
      %v1561 = vpop.f32.mrf.mxu0
      %1562 = vdwg.mxu0
      %v1563 = vmul.f32 %v1560, 0.5
      %v1564 = vmul.f32 %v1560, 0.70710677
      %v1565 = verf.f32.pop %v1564
      %v1566 = vadd.f32 %v1565, 1.0
      %v1567 = vmul.f32 %v1563, %v1566
      %v1568 = vld [vmem:[%s9] sm:$0xff]
      %v1569 = vld [vmem:[%s9 + $0x8] sm:$0xff]
      %v1570 = vld [vmem:[%s9 + $0x10] sm:$0xff]
      %v1571 = vld [vmem:[%s9 + $0x18] sm:$0xff]
      %v1572 = vld [vmem:[%s9 + $0x20] sm:$0xff]
      %v1573 = vld [vmem:[%s9 + $0x28] sm:$0xff]
      %v1574 = vld [vmem:[%s9 + $0x30] sm:$0xff]
      %v1575 = vld [vmem:[%s9 + $0x38] sm:$0xff]
      %v1576 = vld [vmem:[%s9 + $0x40] sm:$0xff]
      %v1577 = vld [vmem:[%s9 + $0x48] sm:$0xff]
      %v1578 = vld [vmem:[%s9 + $0x50] sm:$0xff]
      %v1579 = vld [vmem:[%s9 + $0x58] sm:$0xff]
      %v1580 = vld [vmem:[%s9 + $0x60] sm:$0xff]
      %v1581 = vld [vmem:[%s9 + $0x68] sm:$0xff]
      %v1582 = vld [vmem:[%s9 + $0x70] sm:$0xff]
      %v1583 = vld [vmem:[%s9 + $0x78] sm:$0xff]
      %v1584 = vld [vmem:[%s10] sm:$0x1]
      %v1586 = vlaneseq
      %v1587 = vshrl.u32 %v1586, 7
      %v1588 = vsub.s32 0, %v1587
      %v1589 = vrot.slane %v1584, %v1588
      %1591 = vmatprep.subr.mxu0 0.0
      %1592 = vmatpush1.msra.mxu0 %v1583
      %1593 = vmatprep.subr.mxu0 0.0
      %1594 = vmatpush1.msra.mxu0 %v1582
      %1595 = vmatprep.subr.mxu0 0.0
      %1596 = vmatpush1.msra.mxu0 %v1581
      %1597 = vmatprep.subr.mxu0 0.0
      %1598 = vmatpush1.msra.mxu0 %v1580
      %1599 = vmatprep.subr.mxu0 0.0
      %1600 = vmatpush1.msra.mxu0 %v1579
      %1601 = vmatprep.subr.mxu0 0.0
      %1602 = vmatpush1.msra.mxu0 %v1578
      %1603 = vmatprep.subr.mxu0 0.0
      %1604 = vmatpush1.msra.mxu0 %v1577
      %1605 = vmatprep.subr.mxu0 0.0
      %1606 = vmatpush1.msra.mxu0 %v1576
      %1607 = vmatprep.subr.mxu0 0.0
      %1608 = vmatpush1.msra.mxu0 %v1575
      %1609 = vmatprep.subr.mxu0 0.0
      %1610 = vmatpush1.msra.mxu0 %v1574
      %1611 = vmatprep.subr.mxu0 0.0
      %1612 = vmatpush1.msra.mxu0 %v1573
      %1613 = vmatprep.subr.mxu0 0.0
      %1614 = vmatpush1.msra.mxu0 %v1572
      %1615 = vmatprep.subr.mxu0 0.0
      %1616 = vmatpush1.msra.mxu0 %v1571
      %1617 = vmatprep.subr.mxu0 0.0
      %1618 = vmatpush1.msra.mxu0 %v1570
      %1619 = vmatprep.subr.mxu0 0.0
      %1620 = vmatpush1.msra.mxu0 %v1569
      %1621 = vmatprep.subr.mxu0 0.0
      %1622 = vmatpush1.msra.mxu0 %v1568
      %1623 = vmatprep.subr.mxu0 0.0
      %1624 = vmatpush2.msra.mxu0 0.0
      %1625 = vmatprep.subr.mxu0 0.0
      %1626 = vmatpush2.msra.mxu0 0.0
      %1627 = vmatprep.subr.mxu0 0.0
      %1628 = vmatpush2.msra.mxu0 0.0
      %1629 = vmatprep.subr.mxu0 0.0
      %1630 = vmatpush2.msra.mxu0 0.0
      %1631 = vmatprep.subr.mxu0 0.0
      %1632 = vmatpush2.msra.mxu0 0.0
      %1633 = vmatprep.subr.mxu0 0.0
      %1634 = vmatpush2.msra.mxu0 0.0
      %1635 = vmatprep.subr.mxu0 0.0
      %1636 = vmatpush2.msra.mxu0 0.0
      %1637 = vmatprep.subr.mxu0 0.0
      %1638 = vmatpush2.msra.mxu0 0.0
      %1639 = vmatprep.subr.mxu0 0.0
      %1640 = vmatpush2.msra.mxu0 0.0
      %1641 = vmatprep.subr.mxu0 0.0
      %1642 = vmatpush2.msra.mxu0 0.0
      %1643 = vmatprep.subr.mxu0 0.0
      %1644 = vmatpush2.msra.mxu0 0.0
      %1645 = vmatprep.subr.mxu0 0.0
      %1646 = vmatpush2.msra.mxu0 0.0
      %1647 = vmatprep.subr.mxu0 0.0
      %1648 = vmatpush2.msra.mxu0 0.0
      %1649 = vmatprep.subr.mxu0 0.0
      %1650 = vmatpush2.msra.mxu0 0.0
      %1651 = vmatprep.subr.mxu0 0.0
      %1652 = vmatpush2.msra.mxu0 0.0
      %1653 = vmatprep.subr.mxu0 0.0
      %1654 = vmatpush2.msra.mxu0 0.0
      %1655 = vmatprep.mubr.f32.mxu0 0.0
      %1656 = vmatmul.mubr.f32.gmra.mxu0 %v1567
      %v1657 = vpop.f32.mrf.mxu0
      %v1658 = vadd.f32 %v1589, %v1657
      %v1659 = vpop.f32.mrf.mxu0
      %1660 = vdwg.mxu0
      %v1661 = vadd.f32 %v1478, %v1658
      %1662 = vst.msk [vmem:[%s381] sm:$0xff] %vm385, %v1661
      %p1663 = scmp.lt.s32.totalorder %s22, 1
      %s1664 = scalar_select %p1663, %s22, 1
      %s1665 = smul.addr %s1664, 8
      %s1666 = scalar_lea.vmem %s11, %s1665
      // Predicated region
      $region65: #{vit_block.1} parent=63 // pred_check
        %p1667 = pneg %p276
      $region66: #{vit_block.1} parent=63 // pred_check_branch
        %1669 = sbr.rel (%p1667) target = $region68
      $region67: #{vit_block.1} parent=63 // pred_region
        _
      $region68: #{vit_block.1} parent=63 // pred_fallthru
        _
    $region64: #{vit_block.1} parent=5 // pred_fallthru
      _
    %p1670 = scmp.le.s32.totalorder 2, %s17
    // Predicated region
    $region69: #{vit_block.1} parent=5 // pred_check
      %p1671 = pneg %p1670
    $region70: #{vit_block.1} parent=5 // pred_check_branch
      %1673 = sbr.rel (%p1671) target = $region72
    $region71: #{vit_block.1} parent=5 // pred_region
      %s1674 = ssub.s32 %s17, 2
      // Predicated region
      $region73: #{vit_block.1} parent=71 // pred_check
        %p1675 = pneg %p282
      $region74: #{vit_block.1} parent=71 // pred_check_branch
        %1677 = sbr.rel (%p1675) target = $region76
      $region75: #{vit_block.1} parent=71 // pred_region
        %p1678 = scmp.lt.s32.totalorder %s23, 1
        %s1679 = scalar_select %p1678, %s23, 1
        %s1680 = smul.addr %s1679, 8
        %s1681 = scalar_lea.vmem %s11, %s1680
      $region76: #{vit_block.1} parent=71 // pred_fallthru
        _
    $region72: #{vit_block.1} parent=5 // pred_fallthru
      _
  $region6: #{vit_block.1} parent=0 // loop_footer
    %s21 = sadd.s32 1, %s17
  $region7: #{vit_block.1} parent=0 // loop_footer_branch
    %16 = sbr.rel target = $region3
  $region8: #{vit_block.1} parent=0 // loop_exit
    _

</llo_original>
